<compile_context>
chip_gen: v5e
topology: v5e:2x2
jax: 0.10.0
libtpu: 0.0.40
codegen_flags: <defaults>
</compile_context>

<pallas_src>
import functools

import jax
import jax.numpy as jnp
from jax import lax
from jax.experimental import pallas as pl
from jax.experimental.pallas import tpu as pltpu

# --- small synthetic ALBERT config ------------------------------------------
B = 2            # batch (per COPA choice)
S = 8            # sequence length
H = 32           # hidden size
NH = 4           # attention heads
DH = H // NH     # head dim
I = 64           # FFN intermediate size
NUM_LAYERS = 2   # ALBERT: the single layer's weights are reused NUM_LAYERS times
VOCAB = 100
LN_EPS = 1e-12

P = 2            # COPA choices, folded into the batch
R = P * B        # sequences processed per kernel call
T = R * S        # token rows per kernel call (s-major: row = s*R + b)

LANES = 128
VOCAB_PAD = 128  # vocab padded to the lane width for the one-hot gather matmul
BD = NH * T      # 128: lane-dense "all heads" score width

# --- parameter slab layout (rows of a [SLAB_ROWS, 128] f32 array) ------------
ROW_WEMB = 0                     # [VOCAB_PAD, H]  word embeddings (zero padded)
ROW_WQKV = ROW_WEMB + VOCAB_PAD  # [H, 3H]         fused QKV weight
ROW_WO = ROW_WQKV + H            # [H, H]
ROW_W1 = ROW_WO + H              # [H, I]
ROW_W2 = ROW_W1 + H              # [I, H]
ROW_PT = ROW_W2 + I              # [T, H]          pos_emb[t//R] + type_emb[0]
ROW_AMASK = ROW_PT + T           # [T, BD]         same-sequence additive mask, tiled over heads
ROW_VMASK = ROW_AMASK + T        # [BD, H]         head-block mask for K/V expansion
ROW_VEC = ROW_VMASK + BD         # 16 rows of biases / LN vectors / head weight
SLAB_ROWS = ROW_VEC + 16         # 496 rows -> ~254 KB, one DMA

# vec rows inside the slab (relative to ROW_VEC)
V_LNE_G, V_LNE_B = 0, 1
V_BQKV = 2                       # fused QKV bias (3H wide)
V_BO = 3
V_LN1_G, V_LN1_B = 4, 5
V_B1 = 6                         # FFN bias (I wide)
V_B2 = 7
V_LN2_G, V_LN2_B = 8, 9
V_BC = 10                        # COPA head bias (scalar, lane 0)
V_WCT = 11                       # COPA head weight row (H wide)

OUT_ROWS = 8                     # padded output slab


def _layer_norm(x, g, b):
    mu = jnp.mean(x, axis=-1, keepdims=True)
    xc = x - mu
    var = jnp.mean(xc * xc, axis=-1, keepdims=True)
    return xc * lax.rsqrt(var + LN_EPS) * g + b


def _gelu_new(x):
    # ALBERT's gelu_new (tanh approximation); tanh runs on the EUP
    c = 0.7978845608028654  # sqrt(2/pi)
    return 0.5 * x * (1.0 + jnp.tanh(c * (x + 0.044715 * x * x * x)))


# --- single fused Pallas kernel: embeddings + encoder + COPA head ------------
def albert_copa_kernel(ids_ref, dyn_ref, slab_ref, out_ref):
    # ---- all parameters from ONE slab (static ref-view loads, hoisted) ----
    wemb = slab_ref[ROW_WEMB:ROW_WEMB + VOCAB_PAD, 0:H]
    wqkv = slab_ref[ROW_WQKV:ROW_WQKV + H, 0:3 * H]
    wo = slab_ref[ROW_WO:ROW_WO + H, 0:H]
    w1 = slab_ref[ROW_W1:ROW_W1 + H, 0:I]
    w2 = slab_ref[ROW_W2:ROW_W2 + I, 0:H]
    pos_type = slab_ref[ROW_PT:ROW_PT + T, 0:H]
    amask_bd = slab_ref[ROW_AMASK:ROW_AMASK + T, :]          # [T, BD], static
    vmask = slab_ref[ROW_VMASK:ROW_VMASK + BD, 0:H]          # [BD, H], static
    lne_g = slab_ref[ROW_VEC + V_LNE_G:ROW_VEC + V_LNE_G + 1, 0:H]
    lne_b = slab_ref[ROW_VEC + V_LNE_B:ROW_VEC + V_LNE_B + 1, 0:H]
    bqkv = slab_ref[ROW_VEC + V_BQKV:ROW_VEC + V_BQKV + 1, 0:3 * H]
    bo = slab_ref[ROW_VEC + V_BO:ROW_VEC + V_BO + 1, 0:H]
    ln1_g = slab_ref[ROW_VEC + V_LN1_G:ROW_VEC + V_LN1_G + 1, 0:H]
    ln1_b = slab_ref[ROW_VEC + V_LN1_B:ROW_VEC + V_LN1_B + 1, 0:H]
    b1 = slab_ref[ROW_VEC + V_B1:ROW_VEC + V_B1 + 1, 0:I]
    b2 = slab_ref[ROW_VEC + V_B2:ROW_VEC + V_B2 + 1, 0:H]
    ln2_g = slab_ref[ROW_VEC + V_LN2_G:ROW_VEC + V_LN2_G + 1, 0:H]
    ln2_b = slab_ref[ROW_VEC + V_LN2_B:ROW_VEC + V_LN2_B + 1, 0:H]
    bc = slab_ref[ROW_VEC + V_BC:ROW_VEC + V_BC + 1, 0:1]
    wct = slab_ref[ROW_VEC + V_WCT:ROW_VEC + V_WCT + 1, 0:H]

    pad_bd = dyn_ref[0:1, :]                 # (1 - key_mask) * -10000, tiled over NH blocks
    onehot = dyn_ref[1:1 + B, 0:2]           # one-hot labels [B, 2]

    # ---- embedding gather fused as a one-hot MXU matmul (exact) ----
    viota = lax.broadcasted_iota(jnp.int32, (T, VOCAB_PAD), 1)
    tok_onehot = (ids_ref[...] == viota).astype(jnp.float32)          # [T, 128]
    emb = jnp.dot(tok_onehot, wemb, preferred_element_type=jnp.float32) + pos_type
    x = _layer_norm(emb, lne_g, lne_b)                                # [T, H]

    scale = 1.0 / (DH ** 0.5)
    for _ in range(NUM_LAYERS):              # ALBERT weight sharing: same weights reused
        # fused QKV projection: one MXU push
        qkv = jnp.dot(x, wqkv, preferred_element_type=jnp.float32) + bqkv   # [T, 3H]
        q = qkv[:, 0:H] * scale
        k = qkv[:, H:2 * H]
        v = qkv[:, 2 * H:3 * H]

        # block-diagonal K / V (head h lives in rows h*T:(h+1)*T, lanes h*DH:(h+1)*DH)
        k_bd = jnp.concatenate([k] * NH, axis=0) * vmask                    # [BD, H]
        v_bd = jnp.concatenate([v] * NH, axis=0) * vmask                    # [BD, H]

        # all 4 heads' scores in one lane-dense [T, 128] tile
        s_bd = lax.dot_general(q, k_bd, (((1,), (1,)), ((), ())),
                               preferred_element_type=jnp.float32)          # [T, BD]
        s_bd = s_bd + amask_bd + pad_bd

        # per-block softmax: a single full-row max is a constant shift inside
        # every 32-lane head block, so the per-block softmax is unchanged.
        m = jnp.max(s_bd, axis=-1, keepdims=True)
        e = jnp.exp(s_bd - m)                                               # [T, BD]
        ctx = jnp.dot(e, v_bd, preferred_element_type=jnp.float32)          # [T, H] heads concat'd
        denom = jnp.dot(e, vmask, preferred_element_type=jnp.float32)       # per-head denom, lane-bcast
        ctx = ctx * pl.reciprocal(denom, approx=True)

        attn = jnp.dot(ctx, wo, preferred_element_type=jnp.float32) + bo
        x = _layer_norm(x + attn, ln1_g, ln1_b)

        h1 = _gelu_new(jnp.dot(x, w1, preferred_element_type=jnp.float32) + b1)
        h2 = jnp.dot(h1, w2, preferred_element_type=jnp.float32) + b2
        x = _layer_norm(x + h2, ln2_g, ln2_b)

    # ---- fused COPA head (CLS tokens = rows 0..R-1 in s-major layout) ----
    cls = x[0:R, :]                                              # [R, H]
    y = jnp.sum(cls * wct, axis=-1, keepdims=True) + bc          # [R, 1]
    y0, y1 = y[0:B, :], y[B:2 * B, :]
    logits = jnp.concatenate([y0, y1], axis=-1)                  # [B, 2]
    mlg = jnp.max(logits, axis=-1, keepdims=True)
    elg = jnp.exp(logits - mlg)
    probs = elg / jnp.sum(elg, axis=-1, keepdims=True)           # exact divide for final output

    # torch F.cross_entropy applied to `probs` (double softmax) -- reference-faithful
    pm = jnp.max(probs, axis=-1, keepdims=True)
    lse = pm + jnp.log(jnp.sum(jnp.exp(probs - pm), axis=-1, keepdims=True))
    picked = jnp.sum(probs * onehot, axis=-1, keepdims=True)
    loss = jnp.mean(lse - picked, keepdims=True)                 # [1, 1]

    # pairwise_distance(y0, y1): p=2, eps=1e-6, feature dim of size 1
    diff = y0 - y1 + 1e-6
    loss_adv = jnp.mean(jnp.sqrt(jnp.sum(diff * diff, axis=-1, keepdims=True)),
                        keepdims=True)                           # [1, 1]

    # lane-padded output slab
    out_ref[...] = jnp.zeros_like(out_ref)
    out_ref[0:B, 0:2] = logits
    out_ref[B:2 * B, 0:2] = probs
    out_ref[2 * B:2 * B + 1, 0:2] = jnp.concatenate([loss, loss_adv], axis=-1)


# --- wrapper ------------------------------------------------------------------
_VSPEC = pl.BlockSpec(memory_space=pltpu.MemorySpace.VMEM)


def albert_copa_call(ids_col, dyn, slab):
    # 3 input DMAs + 1 output DMA, no grid, everything VMEM-resident.
    return pl.pallas_call(
        albert_copa_kernel,
        out_shape=jax.ShapeDtypeStruct((OUT_ROWS, LANES), jnp.float32),
        in_specs=[_VSPEC, _VSPEC, _VSPEC],
        out_specs=_VSPEC,
    )(ids_col, dyn, slab)


def albert_copa_forward(params, input_ids_0, input_ids_1,
                        input_mask_0, input_mask_1, labels):
    # minimal glue: pack the dynamic inputs (ids column, mask row, labels).
    ids = jnp.concatenate([input_ids_0, input_ids_1], axis=0).astype(jnp.int32)   # [R, S]
    ids_col = jnp.transpose(ids, (1, 0)).reshape(T, 1)                            # s-major rows
    mask = jnp.concatenate([input_mask_0, input_mask_1],
                           axis=0).astype(jnp.float32)                            # [R, S]
    pad_row = (1.0 - jnp.transpose(mask, (1, 0)).reshape(1, T)) * (-10000.0)
    onehot = jax.nn.one_hot(labels, 2, dtype=jnp.float32)                         # [B, 2]
    dyn = jnp.zeros((1 + B, BD), jnp.float32)
    dyn = dyn.at[0:1, :].set(jnp.tile(pad_row, (1, NH)))
    dyn = dyn.at[1:1 + B, 0:2].set(onehot)

    out = albert_copa_call(ids_col, dyn, params['slab'])
    logits = out[0:B, 0:2]
    probs = out[B:2 * B, 0:2]
    return logits, probs, out[2 * B, 0], out[2 * B, 1]


def init_params(key):
    # TODO(synk): AlbertForSequenceClassification.from_pretrained has no Pallas
    # equivalent; weights are initialized deterministically (normal * 0.02).
    ks = jax.random.split(key, 10)
    std = 0.02

    def nrm(k, shape):
        return jax.random.normal(k, shape, jnp.float32) * std

    word_emb = nrm(ks[0], (VOCAB, H))
    pos_emb = nrm(ks[1], (S, H))
    type_emb = nrm(ks[2], (2, H))
    wq, wk, wv = nrm(ks[3], (H, H)), nrm(ks[4], (H, H)), nrm(ks[5], (H, H))
    wo = nrm(ks[6], (H, H))
    w1 = nrm(ks[7], (H, I))
    w2 = nrm(ks[8], (I, H))
    wc = nrm(ks[9], (H, 1))
    wqkv = jnp.concatenate([wq, wk, wv], axis=1)                      # fused QKV [H, 3H]

    slab = jnp.zeros((SLAB_ROWS, LANES), jnp.float32)
    slab = slab.at[ROW_WEMB:ROW_WEMB + VOCAB, 0:H].set(word_emb)      # padded to 128 rows
    slab = slab.at[ROW_WQKV:ROW_WQKV + H, 0:3 * H].set(wqkv)
    slab = slab.at[ROW_WO:ROW_WO + H, 0:H].set(wo)
    slab = slab.at[ROW_W1:ROW_W1 + H, 0:I].set(w1)
    slab = slab.at[ROW_W2:ROW_W2 + I, 0:H].set(w2)

    # position + token-type(0) embedding per s-major token row (row t -> s = t // R)
    pos_type = pos_emb[jnp.arange(T) // R] + type_emb[0][None, :]
    slab = slab.at[ROW_PT:ROW_PT + T, 0:H].set(pos_type)

    # static same-sequence additive mask (s-major: row r belongs to sequence r % R),
    # tiled across the NH head blocks of the lane-dense score tile
    ri = jnp.arange(T)[:, None]
    ci = jnp.arange(T)[None, :]
    amask = jnp.where((ri % R) == (ci % R), 0.0, -1e9).astype(jnp.float32)   # [T, T]
    slab = slab.at[ROW_AMASK:ROW_AMASK + T, :].set(jnp.tile(amask, (1, NH)))

    # head-block mask for the block-diagonal K / V expansion
    rr = jnp.arange(BD)[:, None]
    cc = jnp.arange(H)[None, :]
    vmask = ((rr // T) == (cc // DH)).astype(jnp.float32)                    # [BD, H]
    slab = slab.at[ROW_VMASK:ROW_VMASK + BD, 0:H].set(vmask)

    # LayerNorm gammas = 1; all biases / betas stay zero-initialized; head weight row
    slab = slab.at[ROW_VEC + V_LNE_G, 0:H].set(1.0)
    slab = slab.at[ROW_VEC + V_LN1_G, 0:H].set(1.0)
    slab = slab.at[ROW_VEC + V_LN2_G, 0:H].set(1.0)
    slab = slab.at[ROW_VEC + V_WCT, 0:H].set(wc[:, 0])

    return {'slab': slab}


if __name__ == "__main__":
    key = jax.random.PRNGKey(0)
    pkey, k0, k1 = jax.random.split(key, 3)
    params = init_params(pkey)

    input_ids_0 = jax.random.randint(k0, (B, S), 0, VOCAB, dtype=jnp.int32)
    input_ids_1 = jax.random.randint(k1, (B, S), 0, VOCAB, dtype=jnp.int32)
    input_mask_0 = jnp.ones((B, S), jnp.float32).at[:, S - 2:].set(0.0)  # padded tail
    input_mask_1 = jnp.ones((B, S), jnp.float32)
    labels = jnp.array([0, 1], dtype=jnp.int32)

    fwd = jax.jit(functools.partial(albert_copa_forward, params))
    logits, probs, loss, loss_adv = fwd(
        input_ids_0, input_ids_1, input_mask_0, input_mask_1, labels)
    jax.block_until_ready((logits, probs, loss, loss_adv))

    assert logits.shape == (B, 2) and probs.shape == (B, 2)
    assert bool(jnp.allclose(jnp.sum(probs, axis=-1), 1.0, atol=1e-5))
    assert bool(jnp.isfinite(loss)) and bool(jnp.isfinite(loss_adv))
    print("KERNEL_OK")
</pallas_src>

<mosaic_0001>
module attributes {stable_mosaic.version = 11 : i64} {
  func.func @albert_copa_kernel(%arg0: memref<32x1xi32, #tpu.memory_space<vmem>>, %arg1: memref<3x128xf32, #tpu.memory_space<vmem>>, %arg2: memref<496x128xf32, #tpu.memory_space<vmem>>, %arg3: memref<8x128xf32, #tpu.memory_space<vmem>>) attributes {dimension_semantics = [], scalar_prefetch = 0 : i64, scratch_operands = 0 : i64, tpu.core_type = #tpu.core_type<tc>} {
    %c0 = arith.constant 0 : index
    %c0_0 = arith.constant 0 : index
    %0 = vector.load %arg2[%c0, %c0_0] : memref<496x128xf32, #tpu.memory_space<vmem>>, vector<128x32xf32>
    %c128 = arith.constant 128 : index
    %c0_1 = arith.constant 0 : index
    %1 = vector.load %arg2[%c128, %c0_1] : memref<496x128xf32, #tpu.memory_space<vmem>>, vector<32x96xf32>
    %c160 = arith.constant 160 : index
    %c0_2 = arith.constant 0 : index
    %2 = vector.load %arg2[%c160, %c0_2] : memref<496x128xf32, #tpu.memory_space<vmem>>, vector<32x32xf32>
    %c192 = arith.constant 192 : index
    %c0_3 = arith.constant 0 : index
    %3 = vector.load %arg2[%c192, %c0_3] : memref<496x128xf32, #tpu.memory_space<vmem>>, vector<32x64xf32>
    %c224 = arith.constant 224 : index
    %c0_4 = arith.constant 0 : index
    %4 = vector.load %arg2[%c224, %c0_4] : memref<496x128xf32, #tpu.memory_space<vmem>>, vector<64x32xf32>
    %c288 = arith.constant 288 : index
    %c0_5 = arith.constant 0 : index
    %5 = vector.load %arg2[%c288, %c0_5] : memref<496x128xf32, #tpu.memory_space<vmem>>, vector<32x32xf32>
    %c320 = arith.constant 320 : index
    %c0_6 = arith.constant 0 : index
    %6 = vector.load %arg2[%c320, %c0_6] : memref<496x128xf32, #tpu.memory_space<vmem>>, vector<32x128xf32>
    %c352 = arith.constant 352 : index
    %c0_7 = arith.constant 0 : index
    %7 = vector.load %arg2[%c352, %c0_7] : memref<496x128xf32, #tpu.memory_space<vmem>>, vector<128x32xf32>
    %c480 = arith.constant 480 : index
    %c0_8 = arith.constant 0 : index
    %8 = vector.load %arg2[%c480, %c0_8] : memref<496x128xf32, #tpu.memory_space<vmem>>, vector<1x32xf32>
    %c481 = arith.constant 481 : index
    %c0_9 = arith.constant 0 : index
    %9 = vector.load %arg2[%c481, %c0_9] : memref<496x128xf32, #tpu.memory_space<vmem>>, vector<1x32xf32>
    %c482 = arith.constant 482 : index
    %c0_10 = arith.constant 0 : index
    %10 = vector.load %arg2[%c482, %c0_10] : memref<496x128xf32, #tpu.memory_space<vmem>>, vector<1x96xf32>
    %c483 = arith.constant 483 : index
    %c0_11 = arith.constant 0 : index
    %11 = vector.load %arg2[%c483, %c0_11] : memref<496x128xf32, #tpu.memory_space<vmem>>, vector<1x32xf32>
    %c484 = arith.constant 484 : index
    %c0_12 = arith.constant 0 : index
    %12 = vector.load %arg2[%c484, %c0_12] : memref<496x128xf32, #tpu.memory_space<vmem>>, vector<1x32xf32>
    %c485 = arith.constant 485 : index
    %c0_13 = arith.constant 0 : index
    %13 = vector.load %arg2[%c485, %c0_13] : memref<496x128xf32, #tpu.memory_space<vmem>>, vector<1x32xf32>
    %c486 = arith.constant 486 : index
    %c0_14 = arith.constant 0 : index
    %14 = vector.load %arg2[%c486, %c0_14] : memref<496x128xf32, #tpu.memory_space<vmem>>, vector<1x64xf32>
    %c487 = arith.constant 487 : index
    %c0_15 = arith.constant 0 : index
    %15 = vector.load %arg2[%c487, %c0_15] : memref<496x128xf32, #tpu.memory_space<vmem>>, vector<1x32xf32>
    %c488 = arith.constant 488 : index
    %c0_16 = arith.constant 0 : index
    %16 = vector.load %arg2[%c488, %c0_16] : memref<496x128xf32, #tpu.memory_space<vmem>>, vector<1x32xf32>
    %c489 = arith.constant 489 : index
    %c0_17 = arith.constant 0 : index
    %17 = vector.load %arg2[%c489, %c0_17] : memref<496x128xf32, #tpu.memory_space<vmem>>, vector<1x32xf32>
    %c490 = arith.constant 490 : index
    %c0_18 = arith.constant 0 : index
    %18 = vector.load %arg2[%c490, %c0_18] : memref<496x128xf32, #tpu.memory_space<vmem>>, vector<1x1xf32>
    %c491 = arith.constant 491 : index
    %c0_19 = arith.constant 0 : index
    %19 = vector.load %arg2[%c491, %c0_19] : memref<496x128xf32, #tpu.memory_space<vmem>>, vector<1x32xf32>
    %c0_20 = arith.constant 0 : index
    %c0_21 = arith.constant 0 : index
    %20 = vector.load %arg1[%c0_20, %c0_21] : memref<3x128xf32, #tpu.memory_space<vmem>>, vector<1x128xf32>
    %c1 = arith.constant 1 : index
    %c0_22 = arith.constant 0 : index
    %21 = vector.load %arg1[%c1, %c0_22] : memref<3x128xf32, #tpu.memory_space<vmem>>, vector<2x2xf32>
    %22 = tpu.iota {dimensions = array<i32: 1>} : vector<32x128xi32>
    %c0_23 = arith.constant 0 : index
    %c0_24 = arith.constant 0 : index
    %23 = vector.load %arg0[%c0_23, %c0_24] : memref<32x1xi32, #tpu.memory_space<vmem>>, vector<32x1xi32>
    %24 = vector.broadcast %23 : vector<32x1xi32> to vector<32x128xi32>
    %25 = arith.cmpi eq, %24, %22 : vector<32x128xi32>
    %26 = arith.extui %25 : vector<32x128xi1> to vector<32x128xi32>
    %27 = arith.sitofp %26 : vector<32x128xi32> to vector<32x128xf32>
    %cst = arith.constant dense<0.000000e+00> : vector<32x32xf32>
    %28 = tpu.matmul %27, %0, %cst {dimension_numbers = #tpu.dot_dimension_numbers<[1], [0], [0], [1], [0, 0, 1, 1], [], []>} : vector<32x128xf32>, vector<128x32xf32>, vector<32x32xf32> -> vector<32x32xf32>
    %29 = arith.addf %28, %5 : vector<32x32xf32>
    %cst_25 = arith.constant dense<0.000000e+00> : vector<32xf32>
    %30 = vector.multi_reduction <add>, %29, %cst_25 [1] : vector<32x32xf32> to vector<32xf32>
    %31 = vector.shape_cast %30 : vector<32xf32> to vector<32x1xf32>
    %cst_26 = arith.constant 3.200000e+01 : f32
    %32 = vector.broadcast %cst_26 : f32 to vector<32x1xf32>
    %33 = arith.divf %31, %32 : vector<32x1xf32>
    %34 = vector.broadcast %33 : vector<32x1xf32> to vector<32x32xf32>
    %35 = arith.subf %29, %34 : vector<32x32xf32>
    %36 = arith.mulf %35, %35 : vector<32x32xf32>
    %cst_27 = arith.constant dense<0.000000e+00> : vector<32xf32>
    %37 = vector.multi_reduction <add>, %36, %cst_27 [1] : vector<32x32xf32> to vector<32xf32>
    %38 = vector.shape_cast %37 : vector<32xf32> to vector<32x1xf32>
    %cst_28 = arith.constant 3.200000e+01 : f32
    %39 = vector.broadcast %cst_28 : f32 to vector<32x1xf32>
    %40 = arith.divf %38, %39 : vector<32x1xf32>
    %cst_29 = arith.constant 9.99999996E-13 : f32
    %41 = vector.broadcast %cst_29 : f32 to vector<32x1xf32>
    %42 = arith.addf %40, %41 : vector<32x1xf32>
    %43 = math.rsqrt %42 : vector<32x1xf32>
    %44 = vector.broadcast %43 : vector<32x1xf32> to vector<32x32xf32>
    %45 = arith.mulf %35, %44 : vector<32x32xf32>
    %46 = vector.broadcast %8 : vector<1x32xf32> to vector<32x32xf32>
    %47 = arith.mulf %45, %46 : vector<32x32xf32>
    %48 = vector.broadcast %9 : vector<1x32xf32> to vector<32x32xf32>
    %49 = arith.addf %47, %48 : vector<32x32xf32>
    %cst_30 = arith.constant dense<0.000000e+00> : vector<32x96xf32>
    %50 = tpu.matmul %49, %1, %cst_30 {dimension_numbers = #tpu.dot_dimension_numbers<[1], [0], [0], [1], [0, 0, 1, 1], [], []>} : vector<32x32xf32>, vector<32x96xf32>, vector<32x96xf32> -> vector<32x96xf32>
    %51 = vector.broadcast %10 : vector<1x96xf32> to vector<32x96xf32>
    %52 = arith.addf %50, %51 : vector<32x96xf32>
    %53 = vector.extract_strided_slice %52 {offsets = [0, 0], sizes = [32, 32], strides = [1, 1]} : vector<32x96xf32> to vector<32x32xf32>
    %cst_31 = arith.constant 0.353553385 : f32
    %54 = vector.broadcast %cst_31 : f32 to vector<32x32xf32>
    %55 = arith.mulf %53, %54 : vector<32x32xf32>
    %56 = vector.extract_strided_slice %52 {offsets = [0, 32], sizes = [32, 32], strides = [1, 1]} : vector<32x96xf32> to vector<32x32xf32>
    %57 = vector.extract_strided_slice %52 {offsets = [0, 64], sizes = [32, 32], strides = [1, 1]} : vector<32x96xf32> to vector<32x32xf32>
    %58 = tpu.concatenate %56, %56, %56, %56 in 0 : vector<32x32xf32>, vector<32x32xf32>, vector<32x32xf32>, vector<32x32xf32> -> vector<128x32xf32>
    %59 = arith.mulf %58, %7 : vector<128x32xf32>
    %60 = tpu.concatenate %57, %57, %57, %57 in 0 : vector<32x32xf32>, vector<32x32xf32>, vector<32x32xf32>, vector<32x32xf32> -> vector<128x32xf32>
    %61 = arith.mulf %60, %7 : vector<128x32xf32>
    %cst_32 = arith.constant dense<0.000000e+00> : vector<32x128xf32>
    %62 = tpu.matmul %55, %59, %cst_32 {dimension_numbers = #tpu.dot_dimension_numbers<[1], [1], [0], [0], [0, 0, 1, 0], [], []>} : vector<32x32xf32>, vector<128x32xf32>, vector<32x128xf32> -> vector<32x128xf32>
    %63 = arith.addf %62, %6 : vector<32x128xf32>
    %64 = vector.broadcast %20 : vector<1x128xf32> to vector<32x128xf32>
    %65 = arith.addf %63, %64 : vector<32x128xf32>
    %cst_33 = arith.constant dense<0xFF800000> : vector<32xf32>
    %66 = vector.multi_reduction <maximumf>, %65, %cst_33 [1] : vector<32x128xf32> to vector<32xf32>
    %67 = vector.shape_cast %66 : vector<32xf32> to vector<32x1xf32>
    %68 = vector.broadcast %67 : vector<32x1xf32> to vector<32x128xf32>
    %69 = arith.subf %65, %68 : vector<32x128xf32>
    %70 = math.exp %69 : vector<32x128xf32>
    %cst_34 = arith.constant dense<0.000000e+00> : vector<32x32xf32>
    %71 = tpu.matmul %70, %61, %cst_34 {dimension_numbers = #tpu.dot_dimension_numbers<[1], [0], [0], [1], [0, 0, 1, 1], [], []>} : vector<32x128xf32>, vector<128x32xf32>, vector<32x32xf32> -> vector<32x32xf32>
    %cst_35 = arith.constant dense<0.000000e+00> : vector<32x32xf32>
    %72 = tpu.matmul %70, %7, %cst_35 {dimension_numbers = #tpu.dot_dimension_numbers<[1], [0], [0], [1], [0, 0, 1, 1], [], []>} : vector<32x128xf32>, vector<128x32xf32>, vector<32x32xf32> -> vector<32x32xf32>
    %73 = tpu.reciprocal %72 {approx = true} : vector<32x32xf32> -> vector<32x32xf32>
    %74 = arith.mulf %71, %73 : vector<32x32xf32>
    %cst_36 = arith.constant dense<0.000000e+00> : vector<32x32xf32>
    %75 = tpu.matmul %74, %2, %cst_36 {dimension_numbers = #tpu.dot_dimension_numbers<[1], [0], [0], [1], [0, 0, 1, 1], [], []>} : vector<32x32xf32>, vector<32x32xf32>, vector<32x32xf32> -> vector<32x32xf32>
    %76 = vector.broadcast %11 : vector<1x32xf32> to vector<32x32xf32>
    %77 = arith.addf %75, %76 : vector<32x32xf32>
    %78 = arith.addf %49, %77 : vector<32x32xf32>
    %cst_37 = arith.constant dense<0.000000e+00> : vector<32xf32>
    %79 = vector.multi_reduction <add>, %78, %cst_37 [1] : vector<32x32xf32> to vector<32xf32>
    %80 = vector.shape_cast %79 : vector<32xf32> to vector<32x1xf32>
    %cst_38 = arith.constant 3.200000e+01 : f32
    %81 = vector.broadcast %cst_38 : f32 to vector<32x1xf32>
    %82 = arith.divf %80, %81 : vector<32x1xf32>
    %83 = vector.broadcast %82 : vector<32x1xf32> to vector<32x32xf32>
    %84 = arith.subf %78, %83 : vector<32x32xf32>
    %85 = arith.mulf %84, %84 : vector<32x32xf32>
    %cst_39 = arith.constant dense<0.000000e+00> : vector<32xf32>
    %86 = vector.multi_reduction <add>, %85, %cst_39 [1] : vector<32x32xf32> to vector<32xf32>
    %87 = vector.shape_cast %86 : vector<32xf32> to vector<32x1xf32>
    %cst_40 = arith.constant 3.200000e+01 : f32
    %88 = vector.broadcast %cst_40 : f32 to vector<32x1xf32>
    %89 = arith.divf %87, %88 : vector<32x1xf32>
    %cst_41 = arith.constant 9.99999996E-13 : f32
    %90 = vector.broadcast %cst_41 : f32 to vector<32x1xf32>
    %91 = arith.addf %89, %90 : vector<32x1xf32>
    %92 = math.rsqrt %91 : vector<32x1xf32>
    %93 = vector.broadcast %92 : vector<32x1xf32> to vector<32x32xf32>
    %94 = arith.mulf %84, %93 : vector<32x32xf32>
    %95 = vector.broadcast %12 : vector<1x32xf32> to vector<32x32xf32>
    %96 = arith.mulf %94, %95 : vector<32x32xf32>
    %97 = vector.broadcast %13 : vector<1x32xf32> to vector<32x32xf32>
    %98 = arith.addf %96, %97 : vector<32x32xf32>
    %cst_42 = arith.constant dense<0.000000e+00> : vector<32x64xf32>
    %99 = tpu.matmul %98, %3, %cst_42 {dimension_numbers = #tpu.dot_dimension_numbers<[1], [0], [0], [1], [0, 0, 1, 1], [], []>} : vector<32x32xf32>, vector<32x64xf32>, vector<32x64xf32> -> vector<32x64xf32>
    %100 = vector.broadcast %14 : vector<1x64xf32> to vector<32x64xf32>
    %101 = arith.addf %99, %100 : vector<32x64xf32>
    %cst_43 = arith.constant 5.000000e-01 : f32
    %102 = vector.broadcast %cst_43 : f32 to vector<32x64xf32>
    %103 = arith.mulf %102, %101 : vector<32x64xf32>
    %cst_44 = arith.constant 4.471500e-02 : f32
    %104 = vector.broadcast %cst_44 : f32 to vector<32x64xf32>
    %105 = arith.mulf %104, %101 : vector<32x64xf32>
    %106 = arith.mulf %105, %101 : vector<32x64xf32>
    %107 = arith.mulf %106, %101 : vector<32x64xf32>
    %108 = arith.addf %101, %107 : vector<32x64xf32>
    %cst_45 = arith.constant 0.797884583 : f32
    %109 = vector.broadcast %cst_45 : f32 to vector<32x64xf32>
    %110 = arith.mulf %109, %108 : vector<32x64xf32>
    %111 = math.tanh %110 : vector<32x64xf32>
    %cst_46 = arith.constant 1.000000e+00 : f32
    %112 = vector.broadcast %cst_46 : f32 to vector<32x64xf32>
    %113 = arith.addf %112, %111 : vector<32x64xf32>
    %114 = arith.mulf %103, %113 : vector<32x64xf32>
    %cst_47 = arith.constant dense<0.000000e+00> : vector<32x32xf32>
    %115 = tpu.matmul %114, %4, %cst_47 {dimension_numbers = #tpu.dot_dimension_numbers<[1], [0], [0], [1], [0, 0, 1, 1], [], []>} : vector<32x64xf32>, vector<64x32xf32>, vector<32x32xf32> -> vector<32x32xf32>
    %116 = vector.broadcast %15 : vector<1x32xf32> to vector<32x32xf32>
    %117 = arith.addf %115, %116 : vector<32x32xf32>
    %118 = arith.addf %98, %117 : vector<32x32xf32>
    %cst_48 = arith.constant dense<0.000000e+00> : vector<32xf32>
    %119 = vector.multi_reduction <add>, %118, %cst_48 [1] : vector<32x32xf32> to vector<32xf32>
    %120 = vector.shape_cast %119 : vector<32xf32> to vector<32x1xf32>
    %cst_49 = arith.constant 3.200000e+01 : f32
    %121 = vector.broadcast %cst_49 : f32 to vector<32x1xf32>
    %122 = arith.divf %120, %121 : vector<32x1xf32>
    %123 = vector.broadcast %122 : vector<32x1xf32> to vector<32x32xf32>
    %124 = arith.subf %118, %123 : vector<32x32xf32>
    %125 = arith.mulf %124, %124 : vector<32x32xf32>
    %cst_50 = arith.constant dense<0.000000e+00> : vector<32xf32>
    %126 = vector.multi_reduction <add>, %125, %cst_50 [1] : vector<32x32xf32> to vector<32xf32>
    %127 = vector.shape_cast %126 : vector<32xf32> to vector<32x1xf32>
    %cst_51 = arith.constant 3.200000e+01 : f32
    %128 = vector.broadcast %cst_51 : f32 to vector<32x1xf32>
    %129 = arith.divf %127, %128 : vector<32x1xf32>
    %cst_52 = arith.constant 9.99999996E-13 : f32
    %130 = vector.broadcast %cst_52 : f32 to vector<32x1xf32>
    %131 = arith.addf %129, %130 : vector<32x1xf32>
    %132 = math.rsqrt %131 : vector<32x1xf32>
    %133 = vector.broadcast %132 : vector<32x1xf32> to vector<32x32xf32>
    %134 = arith.mulf %124, %133 : vector<32x32xf32>
    %135 = vector.broadcast %16 : vector<1x32xf32> to vector<32x32xf32>
    %136 = arith.mulf %134, %135 : vector<32x32xf32>
    %137 = vector.broadcast %17 : vector<1x32xf32> to vector<32x32xf32>
    %138 = arith.addf %136, %137 : vector<32x32xf32>
    %cst_53 = arith.constant dense<0.000000e+00> : vector<32x96xf32>
    %139 = tpu.matmul %138, %1, %cst_53 {dimension_numbers = #tpu.dot_dimension_numbers<[1], [0], [0], [1], [0, 0, 1, 1], [], []>} : vector<32x32xf32>, vector<32x96xf32>, vector<32x96xf32> -> vector<32x96xf32>
    %140 = vector.broadcast %10 : vector<1x96xf32> to vector<32x96xf32>
    %141 = arith.addf %139, %140 : vector<32x96xf32>
    %142 = vector.extract_strided_slice %141 {offsets = [0, 0], sizes = [32, 32], strides = [1, 1]} : vector<32x96xf32> to vector<32x32xf32>
    %cst_54 = arith.constant 0.353553385 : f32
    %143 = vector.broadcast %cst_54 : f32 to vector<32x32xf32>
    %144 = arith.mulf %142, %143 : vector<32x32xf32>
    %145 = vector.extract_strided_slice %141 {offsets = [0, 32], sizes = [32, 32], strides = [1, 1]} : vector<32x96xf32> to vector<32x32xf32>
    %146 = vector.extract_strided_slice %141 {offsets = [0, 64], sizes = [32, 32], strides = [1, 1]} : vector<32x96xf32> to vector<32x32xf32>
    %147 = tpu.concatenate %145, %145, %145, %145 in 0 : vector<32x32xf32>, vector<32x32xf32>, vector<32x32xf32>, vector<32x32xf32> -> vector<128x32xf32>
    %148 = arith.mulf %147, %7 : vector<128x32xf32>
    %149 = tpu.concatenate %146, %146, %146, %146 in 0 : vector<32x32xf32>, vector<32x32xf32>, vector<32x32xf32>, vector<32x32xf32> -> vector<128x32xf32>
    %150 = arith.mulf %149, %7 : vector<128x32xf32>
    %cst_55 = arith.constant dense<0.000000e+00> : vector<32x128xf32>
    %151 = tpu.matmul %144, %148, %cst_55 {dimension_numbers = #tpu.dot_dimension_numbers<[1], [1], [0], [0], [0, 0, 1, 0], [], []>} : vector<32x32xf32>, vector<128x32xf32>, vector<32x128xf32> -> vector<32x128xf32>
    %152 = arith.addf %151, %6 : vector<32x128xf32>
    %153 = vector.broadcast %20 : vector<1x128xf32> to vector<32x128xf32>
    %154 = arith.addf %152, %153 : vector<32x128xf32>
    %cst_56 = arith.constant dense<0xFF800000> : vector<32xf32>
    %155 = vector.multi_reduction <maximumf>, %154, %cst_56 [1] : vector<32x128xf32> to vector<32xf32>
    %156 = vector.shape_cast %155 : vector<32xf32> to vector<32x1xf32>
    %157 = vector.broadcast %156 : vector<32x1xf32> to vector<32x128xf32>
    %158 = arith.subf %154, %157 : vector<32x128xf32>
    %159 = math.exp %158 : vector<32x128xf32>
    %cst_57 = arith.constant dense<0.000000e+00> : vector<32x32xf32>
    %160 = tpu.matmul %159, %150, %cst_57 {dimension_numbers = #tpu.dot_dimension_numbers<[1], [0], [0], [1], [0, 0, 1, 1], [], []>} : vector<32x128xf32>, vector<128x32xf32>, vector<32x32xf32> -> vector<32x32xf32>
    %cst_58 = arith.constant dense<0.000000e+00> : vector<32x32xf32>
    %161 = tpu.matmul %159, %7, %cst_58 {dimension_numbers = #tpu.dot_dimension_numbers<[1], [0], [0], [1], [0, 0, 1, 1], [], []>} : vector<32x128xf32>, vector<128x32xf32>, vector<32x32xf32> -> vector<32x32xf32>
    %162 = tpu.reciprocal %161 {approx = true} : vector<32x32xf32> -> vector<32x32xf32>
    %163 = arith.mulf %160, %162 : vector<32x32xf32>
    %cst_59 = arith.constant dense<0.000000e+00> : vector<32x32xf32>
    %164 = tpu.matmul %163, %2, %cst_59 {dimension_numbers = #tpu.dot_dimension_numbers<[1], [0], [0], [1], [0, 0, 1, 1], [], []>} : vector<32x32xf32>, vector<32x32xf32>, vector<32x32xf32> -> vector<32x32xf32>
    %165 = vector.broadcast %11 : vector<1x32xf32> to vector<32x32xf32>
    %166 = arith.addf %164, %165 : vector<32x32xf32>
    %167 = arith.addf %138, %166 : vector<32x32xf32>
    %cst_60 = arith.constant dense<0.000000e+00> : vector<32xf32>
    %168 = vector.multi_reduction <add>, %167, %cst_60 [1] : vector<32x32xf32> to vector<32xf32>
    %169 = vector.shape_cast %168 : vector<32xf32> to vector<32x1xf32>
    %cst_61 = arith.constant 3.200000e+01 : f32
    %170 = vector.broadcast %cst_61 : f32 to vector<32x1xf32>
    %171 = arith.divf %169, %170 : vector<32x1xf32>
    %172 = vector.broadcast %171 : vector<32x1xf32> to vector<32x32xf32>
    %173 = arith.subf %167, %172 : vector<32x32xf32>
    %174 = arith.mulf %173, %173 : vector<32x32xf32>
    %cst_62 = arith.constant dense<0.000000e+00> : vector<32xf32>
    %175 = vector.multi_reduction <add>, %174, %cst_62 [1] : vector<32x32xf32> to vector<32xf32>
    %176 = vector.shape_cast %175 : vector<32xf32> to vector<32x1xf32>
    %cst_63 = arith.constant 3.200000e+01 : f32
    %177 = vector.broadcast %cst_63 : f32 to vector<32x1xf32>
    %178 = arith.divf %176, %177 : vector<32x1xf32>
    %cst_64 = arith.constant 9.99999996E-13 : f32
    %179 = vector.broadcast %cst_64 : f32 to vector<32x1xf32>
    %180 = arith.addf %178, %179 : vector<32x1xf32>
    %181 = math.rsqrt %180 : vector<32x1xf32>
    %182 = vector.broadcast %181 : vector<32x1xf32> to vector<32x32xf32>
    %183 = arith.mulf %173, %182 : vector<32x32xf32>
    %184 = vector.broadcast %12 : vector<1x32xf32> to vector<32x32xf32>
    %185 = arith.mulf %183, %184 : vector<32x32xf32>
    %186 = vector.broadcast %13 : vector<1x32xf32> to vector<32x32xf32>
    %187 = arith.addf %185, %186 : vector<32x32xf32>
    %cst_65 = arith.constant dense<0.000000e+00> : vector<32x64xf32>
    %188 = tpu.matmul %187, %3, %cst_65 {dimension_numbers = #tpu.dot_dimension_numbers<[1], [0], [0], [1], [0, 0, 1, 1], [], []>} : vector<32x32xf32>, vector<32x64xf32>, vector<32x64xf32> -> vector<32x64xf32>
    %189 = vector.broadcast %14 : vector<1x64xf32> to vector<32x64xf32>
    %190 = arith.addf %188, %189 : vector<32x64xf32>
    %cst_66 = arith.constant 5.000000e-01 : f32
    %191 = vector.broadcast %cst_66 : f32 to vector<32x64xf32>
    %192 = arith.mulf %191, %190 : vector<32x64xf32>
    %cst_67 = arith.constant 4.471500e-02 : f32
    %193 = vector.broadcast %cst_67 : f32 to vector<32x64xf32>
    %194 = arith.mulf %193, %190 : vector<32x64xf32>
    %195 = arith.mulf %194, %190 : vector<32x64xf32>
    %196 = arith.mulf %195, %190 : vector<32x64xf32>
    %197 = arith.addf %190, %196 : vector<32x64xf32>
    %cst_68 = arith.constant 0.797884583 : f32
    %198 = vector.broadcast %cst_68 : f32 to vector<32x64xf32>
    %199 = arith.mulf %198, %197 : vector<32x64xf32>
    %200 = math.tanh %199 : vector<32x64xf32>
    %cst_69 = arith.constant 1.000000e+00 : f32
    %201 = vector.broadcast %cst_69 : f32 to vector<32x64xf32>
    %202 = arith.addf %201, %200 : vector<32x64xf32>
    %203 = arith.mulf %192, %202 : vector<32x64xf32>
    %cst_70 = arith.constant dense<0.000000e+00> : vector<32x32xf32>
    %204 = tpu.matmul %203, %4, %cst_70 {dimension_numbers = #tpu.dot_dimension_numbers<[1], [0], [0], [1], [0, 0, 1, 1], [], []>} : vector<32x64xf32>, vector<64x32xf32>, vector<32x32xf32> -> vector<32x32xf32>
    %205 = vector.broadcast %15 : vector<1x32xf32> to vector<32x32xf32>
    %206 = arith.addf %204, %205 : vector<32x32xf32>
    %207 = arith.addf %187, %206 : vector<32x32xf32>
    %cst_71 = arith.constant dense<0.000000e+00> : vector<32xf32>
    %208 = vector.multi_reduction <add>, %207, %cst_71 [1] : vector<32x32xf32> to vector<32xf32>
    %209 = vector.shape_cast %208 : vector<32xf32> to vector<32x1xf32>
    %cst_72 = arith.constant 3.200000e+01 : f32
    %210 = vector.broadcast %cst_72 : f32 to vector<32x1xf32>
    %211 = arith.divf %209, %210 : vector<32x1xf32>
    %212 = vector.broadcast %211 : vector<32x1xf32> to vector<32x32xf32>
    %213 = arith.subf %207, %212 : vector<32x32xf32>
    %214 = arith.mulf %213, %213 : vector<32x32xf32>
    %cst_73 = arith.constant dense<0.000000e+00> : vector<32xf32>
    %215 = vector.multi_reduction <add>, %214, %cst_73 [1] : vector<32x32xf32> to vector<32xf32>
    %216 = vector.shape_cast %215 : vector<32xf32> to vector<32x1xf32>
    %cst_74 = arith.constant 3.200000e+01 : f32
    %217 = vector.broadcast %cst_74 : f32 to vector<32x1xf32>
    %218 = arith.divf %216, %217 : vector<32x1xf32>
    %cst_75 = arith.constant 9.99999996E-13 : f32
    %219 = vector.broadcast %cst_75 : f32 to vector<32x1xf32>
    %220 = arith.addf %218, %219 : vector<32x1xf32>
    %221 = math.rsqrt %220 : vector<32x1xf32>
    %222 = vector.broadcast %221 : vector<32x1xf32> to vector<32x32xf32>
    %223 = arith.mulf %213, %222 : vector<32x32xf32>
    %224 = vector.broadcast %16 : vector<1x32xf32> to vector<32x32xf32>
    %225 = arith.mulf %223, %224 : vector<32x32xf32>
    %226 = vector.broadcast %17 : vector<1x32xf32> to vector<32x32xf32>
    %227 = arith.addf %225, %226 : vector<32x32xf32>
    %228 = vector.extract_strided_slice %227 {offsets = [0, 0], sizes = [4, 32], strides = [1, 1]} : vector<32x32xf32> to vector<4x32xf32>
    %229 = vector.broadcast %19 : vector<1x32xf32> to vector<4x32xf32>
    %230 = arith.mulf %228, %229 : vector<4x32xf32>
    %cst_76 = arith.constant dense<0.000000e+00> : vector<4xf32>
    %231 = vector.multi_reduction <add>, %230, %cst_76 [1] : vector<4x32xf32> to vector<4xf32>
    %232 = vector.shape_cast %231 : vector<4xf32> to vector<4x1xf32>
    %233 = vector.broadcast %18 : vector<1x1xf32> to vector<4x1xf32>
    %234 = arith.addf %232, %233 : vector<4x1xf32>
    %235 = vector.extract_strided_slice %234 {offsets = [0, 0], sizes = [2, 1], strides = [1, 1]} : vector<4x1xf32> to vector<2x1xf32>
    %236 = vector.extract_strided_slice %234 {offsets = [2, 0], sizes = [2, 1], strides = [1, 1]} : vector<4x1xf32> to vector<2x1xf32>
    %237 = tpu.concatenate %235, %236 in 1 : vector<2x1xf32>, vector<2x1xf32> -> vector<2x2xf32>
    %cst_77 = arith.constant dense<0xFF800000> : vector<2xf32>
    %238 = vector.multi_reduction <maximumf>, %237, %cst_77 [1] : vector<2x2xf32> to vector<2xf32>
    %239 = vector.shape_cast %238 : vector<2xf32> to vector<2x1xf32>
    %240 = vector.broadcast %239 : vector<2x1xf32> to vector<2x2xf32>
    %241 = arith.subf %237, %240 : vector<2x2xf32>
    %242 = math.exp %241 : vector<2x2xf32>
    %cst_78 = arith.constant dense<0.000000e+00> : vector<2xf32>
    %243 = vector.multi_reduction <add>, %242, %cst_78 [1] : vector<2x2xf32> to vector<2xf32>
    %244 = vector.shape_cast %243 : vector<2xf32> to vector<2x1xf32>
    %245 = vector.broadcast %244 : vector<2x1xf32> to vector<2x2xf32>
    %246 = arith.divf %242, %245 : vector<2x2xf32>
    %cst_79 = arith.constant dense<0xFF800000> : vector<2xf32>
    %247 = vector.multi_reduction <maximumf>, %246, %cst_79 [1] : vector<2x2xf32> to vector<2xf32>
    %248 = vector.shape_cast %247 : vector<2xf32> to vector<2x1xf32>
    %249 = vector.broadcast %248 : vector<2x1xf32> to vector<2x2xf32>
    %250 = arith.subf %246, %249 : vector<2x2xf32>
    %251 = math.exp %250 : vector<2x2xf32>
    %cst_80 = arith.constant dense<0.000000e+00> : vector<2xf32>
    %252 = vector.multi_reduction <add>, %251, %cst_80 [1] : vector<2x2xf32> to vector<2xf32>
    %253 = vector.shape_cast %252 : vector<2xf32> to vector<2x1xf32>
    %254 = math.log %253 : vector<2x1xf32>
    %255 = arith.addf %248, %254 : vector<2x1xf32>
    %256 = arith.mulf %246, %21 : vector<2x2xf32>
    %cst_81 = arith.constant dense<0.000000e+00> : vector<2xf32>
    %257 = vector.multi_reduction <add>, %256, %cst_81 [1] : vector<2x2xf32> to vector<2xf32>
    %258 = vector.shape_cast %257 : vector<2xf32> to vector<2x1xf32>
    %259 = arith.subf %255, %258 : vector<2x1xf32>
    %260 = vector.shape_cast %259 : vector<2x1xf32> to vector<1x2x1xf32>
    %cst_82 = arith.constant dense<0.000000e+00> : vector<1xf32>
    %261 = vector.multi_reduction <add>, %260, %cst_82 [1, 2] : vector<1x2x1xf32> to vector<1xf32>
    %262 = vector.shape_cast %261 : vector<1xf32> to vector<1x1x1xf32>
    %263 = vector.extract %262[0, 0, 0] : f32 from vector<1x1x1xf32>
    %264 = vector.broadcast %263 : f32 to vector<1x1xf32>
    %cst_83 = arith.constant 2.000000e+00 : f32
    %265 = vector.broadcast %cst_83 : f32 to vector<1x1xf32>
    %266 = arith.divf %264, %265 : vector<1x1xf32>
    %267 = arith.subf %235, %236 : vector<2x1xf32>
    %cst_84 = arith.constant 9.99999997E-7 : f32
    %268 = vector.broadcast %cst_84 : f32 to vector<2x1xf32>
    %269 = arith.addf %267, %268 : vector<2x1xf32>
    %270 = arith.mulf %269, %269 : vector<2x1xf32>
    %cst_85 = arith.constant dense<0.000000e+00> : vector<2xf32>
    %271 = vector.multi_reduction <add>, %270, %cst_85 [1] : vector<2x1xf32> to vector<2xf32>
    %272 = vector.shape_cast %271 : vector<2xf32> to vector<2x1xf32>
    %273 = math.sqrt %272 : vector<2x1xf32>
    %274 = vector.shape_cast %273 : vector<2x1xf32> to vector<1x2x1xf32>
    %cst_86 = arith.constant dense<0.000000e+00> : vector<1xf32>
    %275 = vector.multi_reduction <add>, %274, %cst_86 [1, 2] : vector<1x2x1xf32> to vector<1xf32>
    %276 = vector.shape_cast %275 : vector<1xf32> to vector<1x1x1xf32>
    %277 = vector.extract %276[0, 0, 0] : f32 from vector<1x1x1xf32>
    %278 = vector.broadcast %277 : f32 to vector<1x1xf32>
    %cst_87 = arith.constant 2.000000e+00 : f32
    %279 = vector.broadcast %cst_87 : f32 to vector<1x1xf32>
    %280 = arith.divf %278, %279 : vector<1x1xf32>
    %cst_88 = arith.constant 0.000000e+00 : f32
    %281 = vector.broadcast %cst_88 : f32 to vector<8x128xf32>
    %c0_89 = arith.constant 0 : index
    %c0_90 = arith.constant 0 : index
    %282 = vector.load %arg3[%c0_89, %c0_90] : memref<8x128xf32, #tpu.memory_space<vmem>>, vector<8x128xf32>
    tpu.vector_store %arg3[%c0_89, %c0_90], %281 {strides = array<i32>} : memref<8x128xf32, #tpu.memory_space<vmem>>, vector<8x128xf32>,
    %c0_91 = arith.constant 0 : index
    %c0_92 = arith.constant 0 : index
    %283 = vector.load %arg3[%c0_91, %c0_92] : memref<8x128xf32, #tpu.memory_space<vmem>>, vector<2x2xf32>
    tpu.vector_store %arg3[%c0_91, %c0_92], %237 {strides = array<i32>} : memref<8x128xf32, #tpu.memory_space<vmem>>, vector<2x2xf32>,
    %c2 = arith.constant 2 : index
    %c0_93 = arith.constant 0 : index
    %284 = vector.load %arg3[%c2, %c0_93] : memref<8x128xf32, #tpu.memory_space<vmem>>, vector<2x2xf32>
    tpu.vector_store %arg3[%c2, %c0_93], %246 {strides = array<i32>} : memref<8x128xf32, #tpu.memory_space<vmem>>, vector<2x2xf32>,
    %285 = tpu.concatenate %266, %280 in 1 : vector<1x1xf32>, vector<1x1xf32> -> vector<1x2xf32>
    %c4 = arith.constant 4 : index
    %c0_94 = arith.constant 0 : index
    %286 = vector.load %arg3[%c4, %c0_94] : memref<8x128xf32, #tpu.memory_space<vmem>>, vector<1x2xf32>
    tpu.vector_store %arg3[%c4, %c0_94], %285 {strides = array<i32>} : memref<8x128xf32, #tpu.memory_space<vmem>>, vector<1x2xf32>,
    return
  }
}

</mosaic_0001>

<llo_original>
// kernel: albert_copa_forward.1
$region0: #{albert_copa_forward.1}
  #allocation0 [shape = 'u32[]', space=smem, size = 0x4, offset = 0x4, fixed_abs, tag = 'smem constant byte address 0x4 - core index']
  #allocation1 [shape = 'u32[72,128]{1,0:T(1,128)}', space=vmem, size = 0x9000, scoped, tag = 'internal scratch']
  %s0 = inlined_call_operand.vmem [shape: s32[32,1], index: 0, kind: input, shape index: {}]
  %s1 = inlined_call_operand.vmem [shape: f32[3,128], index: 1, kind: input, shape index: {}]
  %s2 = inlined_call_operand.hbm [shape: f32[496,128], index: 2, kind: input, shape index: {}]
  %s3 = inlined_call_operand.vmem [shape: f32[8,128], index: 3, kind: output, shape index: {}]
  %s4 = sld [smem:[#allocation0]]
  $region26: #{albert_copa_forward.1} parent=0
    _
  %s6 = ssub.s32 1, %s4
  %s7 = scalar_select 0, %s6, %s4
  $region1: #{albert_copa_forward.1} parent=0
    #allocation2 [shape = 'u8[253952]{0}', space=vmem, size = 0x3e000, scoped, tag = 'input window, operand 2, single buffered']
    #allocation3 [shape = 's32[1]{0}', space=sflag, size = 0x4, scoped, tag = 'scoped memory for albert_copa_forward.1']
    %8 = vsyncpa [#allocation3], 0
    // Predicated region
    $region2: #{albert_copa_forward.1} parent=1 // pred_check
      _
    $region3: #{albert_copa_forward.1} parent=1 // pred_check_branch
      %10 = sbr.rel (0) target = $region5
    $region4: #{albert_copa_forward.1} parent=1 // pred_region
      _
    $region5: #{albert_copa_forward.1} parent=1 // pred_fallthru
      _
    // Predicated region
    $region6: #{albert_copa_forward.1} parent=1 // pred_check
      _
    $region7: #{albert_copa_forward.1} parent=1 // pred_check_branch
      %12 = sbr.rel (0) target = $region9
    $region8: #{albert_copa_forward.1} parent=1 // pred_region
      _
    $region9: #{albert_copa_forward.1} parent=1 // pred_fallthru
      _
    // Predicated region
    $region10: #{albert_copa_forward.1} parent=1 // pred_check
      _
    $region11: #{albert_copa_forward.1} parent=1 // pred_check_branch
      %14 = sbr.rel (0) target = $region13
    $region12: #{albert_copa_forward.1} parent=1 // pred_region
      %16 = vsyncadd [#allocation3], 0
      %s17 = sshll.u32 %s2, 4
      %s18 = int_to_ptr.hbm [resolvable:$true] %s17
      %s19 = sshll.u32 [#allocation2], 4
      %s20 = int_to_ptr.vmem [resolvable:$true] %s19
      %25 = dma.hbm_to_vmem [thread:$0]  %s18, 7936, %s20, [#allocation3], 128, 128, 8
    $region13: #{albert_copa_forward.1} parent=1 // pred_fallthru
      _
    // Predicated region
    $region14: #{albert_copa_forward.1} parent=1 // pred_check
      _
    $region15: #{albert_copa_forward.1} parent=1 // pred_check_branch
      %27 = sbr.rel (0) target = $region17
    $region16: #{albert_copa_forward.1} parent=1 // pred_region
      %29 = dma.done [#allocation3], 7936
    $region17: #{albert_copa_forward.1} parent=1 // pred_fallthru
      _
    %v30 = vld [vmem:[#allocation2] sm:$0xff]
    %v31 = vld [vmem:[#allocation2 + $0x8] sm:$0xff]
    %v32 = vld [vmem:[#allocation2 + $0x10] sm:$0xff]
    %v33 = vld [vmem:[#allocation2 + $0x18] sm:$0xff]
    %v34 = vld [vmem:[#allocation2 + $0x20] sm:$0xff]
    %v35 = vld [vmem:[#allocation2 + $0x28] sm:$0xff]
    %v36 = vld [vmem:[#allocation2 + $0x30] sm:$0xff]
    %v37 = vld [vmem:[#allocation2 + $0x38] sm:$0xff]
    %v38 = vld [vmem:[#allocation2 + $0x40] sm:$0xff]
    %v39 = vld [vmem:[#allocation2 + $0x48] sm:$0xff]
    %v40 = vld [vmem:[#allocation2 + $0x50] sm:$0xff]
    %v41 = vld [vmem:[#allocation2 + $0x58] sm:$0xff]
    %v42 = vld [vmem:[#allocation2 + $0x60] sm:$0xff]
    %v43 = vld [vmem:[#allocation2 + $0x68] sm:$0xff]
    %v44 = vld [vmem:[#allocation2 + $0x70] sm:$0xff]
    %v45 = vld [vmem:[#allocation2 + $0x78] sm:$0xff]
    %v46 = vld [vmem:[#allocation2 + $0x80] sm:$0xff]
    %v47 = vld [vmem:[#allocation2 + $0x88] sm:$0xff]
    %v48 = vld [vmem:[#allocation2 + $0x90] sm:$0xff]
    %v49 = vld [vmem:[#allocation2 + $0x98] sm:$0xff]
    %v50 = vld [vmem:[#allocation2 + $0xa0] sm:$0xff]
    %v51 = vld [vmem:[#allocation2 + $0xa8] sm:$0xff]
    %v52 = vld [vmem:[#allocation2 + $0xb0] sm:$0xff]
    %v53 = vld [vmem:[#allocation2 + $0xb8] sm:$0xff]
    %v54 = vld [vmem:[#allocation2 + $0xc0] sm:$0xff]
    %v55 = vld [vmem:[#allocation2 + $0xc8] sm:$0xff]
    %v56 = vld [vmem:[#allocation2 + $0xd0] sm:$0xff]
    %v57 = vld [vmem:[#allocation2 + $0xd8] sm:$0xff]
    %v58 = vld [vmem:[#allocation2 + $0xe0] sm:$0xff]
    %v59 = vld [vmem:[#allocation2 + $0xe8] sm:$0xff]
    %v60 = vld [vmem:[#allocation2 + $0xf0] sm:$0xff]
    %v61 = vld [vmem:[#allocation2 + $0xf8] sm:$0xff]
    %v62 = vld [vmem:[#allocation2 + $0x100] sm:$0xff]
    %v63 = vld [vmem:[#allocation2 + $0x108] sm:$0xff]
    %v64 = vld [vmem:[#allocation2 + $0x110] sm:$0xff]
    %v65 = vld [vmem:[#allocation2 + $0x118] sm:$0xff]
    %v66 = vld [vmem:[#allocation2 + $0x120] sm:$0xff]
    %v67 = vld [vmem:[#allocation2 + $0x128] sm:$0xff]
    %v68 = vld [vmem:[#allocation2 + $0x130] sm:$0xff]
    %v69 = vld [vmem:[#allocation2 + $0x138] sm:$0xff]
    %v70 = vld [vmem:[#allocation2 + $0x140] sm:$0xff]
    %v71 = vld [vmem:[#allocation2 + $0x148] sm:$0xff]
    %v72 = vld [vmem:[#allocation2 + $0x150] sm:$0xff]
    %v73 = vld [vmem:[#allocation2 + $0x158] sm:$0xff]
    %v74 = vld [vmem:[#allocation2 + $0x160] sm:$0xff]
    %v75 = vld [vmem:[#allocation2 + $0x168] sm:$0xff]
    %v76 = vld [vmem:[#allocation2 + $0x170] sm:$0xff]
    %v77 = vld [vmem:[#allocation2 + $0x178] sm:$0xff]
    %v78 = vld [vmem:[#allocation2 + $0x180] sm:$0xff]
    %v79 = vld [vmem:[#allocation2 + $0x188] sm:$0xff]
    %v80 = vld [vmem:[#allocation2 + $0x190] sm:$0xff]
    %v81 = vld [vmem:[#allocation2 + $0x198] sm:$0xff]
    %v82 = vld [vmem:[#allocation2 + $0x1a0] sm:$0xff]
    %v83 = vld [vmem:[#allocation2 + $0x1a8] sm:$0xff]
    %v84 = vld [vmem:[#allocation2 + $0x1b0] sm:$0xff]
    %v85 = vld [vmem:[#allocation2 + $0x1b8] sm:$0xff]
    %v86 = vld [vmem:[#allocation2 + $0x1c0] sm:$0xff]
    %v87 = vld [vmem:[#allocation2 + $0x1c8] sm:$0xff]
    %v88 = vld [vmem:[#allocation2 + $0x1d0] sm:$0xff]
    %v89 = vld [vmem:[#allocation2 + $0x1d8] sm:$0xff]
    %v90 = vld [vmem:[#allocation2 + $0x1e0] sm:$0x1]
    %v91 = vld [vmem:[#allocation2 + $0x1e1] sm:$0x1]
    %v92 = vld [vmem:[#allocation2 + $0x1e2] sm:$0x1]
    %v93 = vld [vmem:[#allocation2 + $0x1e3] sm:$0x1]
    %v94 = vld [vmem:[#allocation2 + $0x1e4] sm:$0x1]
    %v95 = vld [vmem:[#allocation2 + $0x1e5] sm:$0x1]
    %v96 = vld [vmem:[#allocation2 + $0x1e6] sm:$0x1]
    %v97 = vld [vmem:[#allocation2 + $0x1e7] sm:$0x1]
    %v98 = vld [vmem:[#allocation2 + $0x1e8] sm:$0x1]
    %v99 = vld [vmem:[#allocation2 + $0x1e9] sm:$0x1]
    %v100 = vld [vmem:[#allocation2 + $0x1ea] sm:$0x1]
    %v101 = vld [vmem:[#allocation2 + $0x1eb] sm:$0x1]
    %v102 = vld [vmem:[%s1] sm:$0x1]
    %v103 = vld [vmem:[%s1 + $0x1] sm:$0x3]
    %v104 = vlaneseq
    %v105 = vand.u32 %v104, 127
    %v106 = vld [vmem:[%s0] sm:$0xff]
    %v107 = vld [vmem:[%s0 + $0x8] sm:$0xff]
    %v108 = vld [vmem:[%s0 + $0x10] sm:$0xff]
    %v109 = vld [vmem:[%s0 + $0x18] sm:$0xff]
    %110 = vset.pattern.permute.xlu0 0
    %111 = vperm.xlu0 %110, %v106
    %v112 = vpop.permute.xlu0 %111
    %113 = vset.pattern.permute.xlu0 0
    %114 = vperm.xlu0 %113, %v107
    %v115 = vpop.permute.xlu0 %114
    %116 = vset.pattern.permute.xlu0 0
    %117 = vperm.xlu0 %116, %v108
    %v118 = vpop.permute.xlu0 %117
    %119 = vset.pattern.permute.xlu0 0
    %120 = vperm.xlu0 %119, %v109
    %v121 = vpop.permute.xlu0 %120
    %vm122 = vcmp.eq.s32.totalorder %v112, %v105
    %vm123 = vcmp.eq.s32.totalorder %v115, %v105
    %vm124 = vcmp.eq.s32.totalorder %v118, %v105
    %vm125 = vcmp.eq.s32.totalorder %v121, %v105
    %v126 = vsel %vm122, 1, 0
    %v127 = vsel %vm123, 1, 0
    %v128 = vsel %vm124, 1, 0
    %v129 = vsel %vm125, 1, 0
    %v130 = vcvt.s32.f32 %v126
    %v131 = vcvt.s32.f32 %v127
    %v132 = vcvt.s32.f32 %v128
    %v133 = vcvt.s32.f32 %v129
    %134 = vmatpush.msra.mxu0 %v45
    %135 = vmatpush.msra.mxu0 %v44
    %136 = vmatpush.msra.mxu0 %v43
    %137 = vmatpush.msra.mxu0 %v42
    %138 = vmatpush.msra.mxu0 %v41
    %139 = vmatpush.msra.mxu0 %v40
    %140 = vmatpush.msra.mxu0 %v39
    %141 = vmatpush.msra.mxu0 %v38
    %142 = vmatpush.msra.mxu0 %v37
    %143 = vmatpush.msra.mxu0 %v36
    %144 = vmatpush.msra.mxu0 %v35
    %145 = vmatpush.msra.mxu0 %v34
    %146 = vmatpush.msra.mxu0 %v33
    %147 = vmatpush.msra.mxu0 %v32
    %148 = vmatpush.msra.mxu0 %v31
    %149 = vmatpush.msra.mxu0 %v30
    %150 = vmatmul.f32.gmra.mxu0 %v130
    %v151 = vpop.f32.mrf.mxu0
    %v152 = vadd.f32 %v66, %v151
    %153 = vmatmul.f32.gmra.mxu0 %v131
    %v154 = vpop.f32.mrf.mxu0
    %v155 = vadd.f32 %v67, %v154
    %156 = vmatmul.f32.gmra.mxu0 %v132
    %v157 = vpop.f32.mrf.mxu0
    %v158 = vadd.f32 %v68, %v157
    %159 = vmatmul.f32.gmra.mxu0 %v133
    %v160 = vpop.f32.mrf.mxu0
    %v161 = vadd.f32 %v69, %v160
    %162 = vdwg.mxu0
    %vm163 = vcmask 261120
    %v164 = vsel %vm163, %v152, 0.0
    %165 = vadd.xlane.f32.xlu0 %v164
    %v166 = vpop.xlane.xlu0 %165
    %v167 = vsel %vm163, %v155, 0.0
    %168 = vadd.xlane.f32.xlu0 %v167
    %v169 = vpop.xlane.xlu0 %168
    %v170 = vsel %vm163, %v158, 0.0
    %171 = vadd.xlane.f32.xlu0 %v170
    %v172 = vpop.xlane.xlu0 %171
    %v173 = vsel %vm163, %v161, 0.0
    %174 = vadd.xlane.f32.xlu0 %v173
    %v175 = vpop.xlane.xlu0 %174
    %v176 = vrcp.pop 32.0
    %v177 = vmul.f32 32.0, %v176
    %v178 = vsub.f32 1.0, %v177
    %v179 = vmul.f32 %v176, %v178
    %v180 = vadd.f32 %v176, %v179
    %vm181 = vweird.f32 %v176
    %v182 = vsel %vm181, %v176, %v180
    %v183 = vmul.f32 %v166, %v182
    %v184 = vmul.f32 %v169, %v182
    %v185 = vmul.f32 %v172, %v182
    %v186 = vmul.f32 %v175, %v182
    %v187 = vsub.f32 %v152, %v183
    %v188 = vsub.f32 %v155, %v184
    %v189 = vsub.f32 %v158, %v185
    %v190 = vsub.f32 %v161, %v186
    %v191 = vmul.f32 %v187, %v187
    %v192 = vmul.f32 %v188, %v188
    %v193 = vmul.f32 %v189, %v189
    %v194 = vmul.f32 %v190, %v190
    %v195 = vsel %vm163, %v191, 0.0
    %196 = vadd.xlane.f32.xlu0 %v195
    %v197 = vpop.xlane.xlu0 %196
    %v198 = vsel %vm163, %v192, 0.0
    %199 = vadd.xlane.f32.xlu0 %v198
    %v200 = vpop.xlane.xlu0 %199
    %v201 = vsel %vm163, %v193, 0.0
    %202 = vadd.xlane.f32.xlu0 %v201
    %v203 = vpop.xlane.xlu0 %202
    %v204 = vsel %vm163, %v194, 0.0
    %205 = vadd.xlane.f32.xlu0 %v204
    %v206 = vpop.xlane.xlu0 %205
    %v207 = vmul.f32 %v197, %v182
    %v208 = vmul.f32 %v200, %v182
    %v209 = vmul.f32 %v203, %v182
    %v210 = vmul.f32 %v206, %v182
    %v211 = vadd.f32 %v207, 1e-12
    %v212 = vadd.f32 %v208, 1e-12
    %v213 = vadd.f32 %v209, 1e-12
    %v214 = vadd.f32 %v210, 1e-12
    %v215 = vrsqrt.pop %v211
    %v216 = vmul.f32 %v215, %v211
    %v217 = vmul.f32 %v216, %v215
    %v218 = vmul.f32 0.5, %v217
    %v219 = vsub.f32 1.5, %v218
    %v220 = vmul.f32 %v215, %v219
    %vm221 = vweird.f32 %v211
    %vm222 = vweird.f32 %v215
    %vm223 = vmor %vm221, %vm222
    %v224 = vsel %vm223, %v215, %v220
    %v225 = vrsqrt.pop %v212
    %v226 = vmul.f32 %v225, %v212
    %v227 = vmul.f32 %v226, %v225
    %v228 = vmul.f32 0.5, %v227
    %v229 = vsub.f32 1.5, %v228
    %v230 = vmul.f32 %v225, %v229
    %vm231 = vweird.f32 %v212
    %vm232 = vweird.f32 %v225
    %vm233 = vmor %vm231, %vm232
    %v234 = vsel %vm233, %v225, %v230
    %v235 = vrsqrt.pop %v213
    %v236 = vmul.f32 %v235, %v213
    %v237 = vmul.f32 %v236, %v235
    %v238 = vmul.f32 0.5, %v237
    %v239 = vsub.f32 1.5, %v238
    %v240 = vmul.f32 %v235, %v239
    %vm241 = vweird.f32 %v213
    %vm242 = vweird.f32 %v235
    %vm243 = vmor %vm241, %vm242
    %v244 = vsel %vm243, %v235, %v240
    %v245 = vrsqrt.pop %v214
    %v246 = vmul.f32 %v245, %v214
    %v247 = vmul.f32 %v246, %v245
    %v248 = vmul.f32 0.5, %v247
    %v249 = vsub.f32 1.5, %v248
    %v250 = vmul.f32 %v245, %v249
    %vm251 = vweird.f32 %v214
    %vm252 = vweird.f32 %v245
    %vm253 = vmor %vm251, %vm252
    %v254 = vsel %vm253, %v245, %v250
    %v255 = vmul.f32 %v187, %v224
    %v256 = vmul.f32 %v188, %v234
    %v257 = vmul.f32 %v189, %v244
    %v258 = vmul.f32 %v190, %v254
    %v259 = vperm.slane %v90, 0
    %v260 = vmul.f32 %v255, %v259
    %v261 = vmul.f32 %v256, %v259
    %v262 = vmul.f32 %v257, %v259
    %v263 = vmul.f32 %v258, %v259
    %v264 = vperm.slane %v91, 0
    %v265 = vadd.f32 %v260, %v264
    %v266 = vadd.f32 %v261, %v264
    %v267 = vadd.f32 %v262, %v264
    %v268 = vadd.f32 %v263, %v264
    %v269 = vperm.slane %v92, 0
    %v271 = vsel %vm163, %v265, 0
    %v274 = vsel %vm163, %v266, 0
    %v277 = vsel %vm163, %v267, 0
    %v280 = vsel %vm163, %v268, 0
    %282 = vmatpush.msra.mxu0 0.0
    %283 = vmatpush.msra.mxu0 0.0
    %284 = vmatpush.msra.mxu0 0.0
    %285 = vmatpush.msra.mxu0 0.0
    %286 = vmatpush.msra.mxu0 0.0
    %287 = vmatpush.msra.mxu0 0.0
    %288 = vmatpush.msra.mxu0 0.0
    %289 = vmatpush.msra.mxu0 0.0
    %290 = vmatpush.msra.mxu0 0.0
    %291 = vmatpush.msra.mxu0 0.0
    %292 = vmatpush.msra.mxu0 0.0
    %293 = vmatpush.msra.mxu0 0.0
    %294 = vmatpush.msra.mxu0 %v49
    %295 = vmatpush.msra.mxu0 %v48
    %296 = vmatpush.msra.mxu0 %v47
    %297 = vmatpush.msra.mxu0 %v46
    %298 = vmatmul.f32.gmra.mxu0 %v271
    %v299 = vpop.f32.mrf.mxu0
    %v300 = vadd.f32 %v269, %v299
    %301 = vmatmul.f32.gmra.mxu0 %v274
    %v302 = vpop.f32.mrf.mxu0
    %v303 = vadd.f32 %v269, %v302
    %304 = vmatmul.f32.gmra.mxu0 %v277
    %v305 = vpop.f32.mrf.mxu0
    %v306 = vadd.f32 %v269, %v305
    %307 = vmatmul.f32.gmra.mxu0 %v280
    %v308 = vpop.f32.mrf.mxu0
    %v309 = vadd.f32 %v269, %v308
    %310 = vdwg.mxu0
    %v311 = vmul.f32 %v300, 0.35355338
    %v312 = vmul.f32 %v303, 0.35355338
    %v313 = vmul.f32 %v306, 0.35355338
    %v314 = vmul.f32 %v309, 0.35355338
    %331 = vrot.lane.b32.xlu0 %v74, 32
    %v332 = vpop.permute.xlu0 %331
    %333 = vrot.lane.b32.xlu0 %v75, 32
    %v334 = vpop.permute.xlu0 %333
    %335 = vrot.lane.b32.xlu0 %v76, 32
    %v336 = vpop.permute.xlu0 %335
    %337 = vrot.lane.b32.xlu0 %v77, 32
    %v338 = vpop.permute.xlu0 %337
    %339 = vrot.lane.b32.xlu0 %v78, 32
    %v340 = vpop.permute.xlu0 %339
    %341 = vrot.lane.b32.xlu0 %v79, 32
    %v342 = vpop.permute.xlu0 %341
    %343 = vrot.lane.b32.xlu0 %v80, 32
    %v344 = vpop.permute.xlu0 %343
    %345 = vrot.lane.b32.xlu0 %v81, 32
    %v346 = vpop.permute.xlu0 %345
    %347 = vrot.lane.b32.xlu0 %v82, 32
    %v348 = vpop.permute.xlu0 %347
    %349 = vrot.lane.b32.xlu0 %v83, 32
    %v350 = vpop.permute.xlu0 %349
    %351 = vrot.lane.b32.xlu0 %v84, 32
    %v352 = vpop.permute.xlu0 %351
    %353 = vrot.lane.b32.xlu0 %v85, 32
    %v354 = vpop.permute.xlu0 %353
    %355 = vrot.lane.b32.xlu0 %v86, 32
    %v356 = vpop.permute.xlu0 %355
    %357 = vrot.lane.b32.xlu0 %v87, 32
    %v358 = vpop.permute.xlu0 %357
    %359 = vrot.lane.b32.xlu0 %v88, 32
    %v360 = vpop.permute.xlu0 %359
    %361 = vrot.lane.b32.xlu0 %v89, 32
    %v362 = vpop.permute.xlu0 %361
    %v379 = vmul.f32 %v300, %v332
    %v380 = vmul.f32 %v303, %v334
    %v381 = vmul.f32 %v306, %v336
    %v382 = vmul.f32 %v309, %v338
    %v383 = vmul.f32 %v300, %v340
    %v384 = vmul.f32 %v303, %v342
    %v385 = vmul.f32 %v306, %v344
    %v386 = vmul.f32 %v309, %v346
    %v387 = vmul.f32 %v300, %v348
    %v388 = vmul.f32 %v303, %v350
    %v389 = vmul.f32 %v306, %v352
    %v390 = vmul.f32 %v309, %v354
    %v391 = vmul.f32 %v300, %v356
    %v392 = vmul.f32 %v303, %v358
    %v393 = vmul.f32 %v306, %v360
    %v394 = vmul.f32 %v309, %v362
    %395 = vrot.lane.b32.xlu0 %v74, 64
    %v396 = vpop.permute.xlu0 %395
    %397 = vrot.lane.b32.xlu0 %v75, 64
    %v398 = vpop.permute.xlu0 %397
    %399 = vrot.lane.b32.xlu0 %v76, 64
    %v400 = vpop.permute.xlu0 %399
    %401 = vrot.lane.b32.xlu0 %v77, 64
    %v402 = vpop.permute.xlu0 %401
    %403 = vrot.lane.b32.xlu0 %v78, 64
    %v404 = vpop.permute.xlu0 %403
    %405 = vrot.lane.b32.xlu0 %v79, 64
    %v406 = vpop.permute.xlu0 %405
    %407 = vrot.lane.b32.xlu0 %v80, 64
    %v408 = vpop.permute.xlu0 %407
    %409 = vrot.lane.b32.xlu0 %v81, 64
    %v410 = vpop.permute.xlu0 %409
    %411 = vrot.lane.b32.xlu0 %v82, 64
    %v412 = vpop.permute.xlu0 %411
    %413 = vrot.lane.b32.xlu0 %v83, 64
    %v414 = vpop.permute.xlu0 %413
    %415 = vrot.lane.b32.xlu0 %v84, 64
    %v416 = vpop.permute.xlu0 %415
    %417 = vrot.lane.b32.xlu0 %v85, 64
    %v418 = vpop.permute.xlu0 %417
    %419 = vrot.lane.b32.xlu0 %v86, 64
    %v420 = vpop.permute.xlu0 %419
    %421 = vrot.lane.b32.xlu0 %v87, 64
    %v422 = vpop.permute.xlu0 %421
    %423 = vrot.lane.b32.xlu0 %v88, 64
    %v424 = vpop.permute.xlu0 %423
    %425 = vrot.lane.b32.xlu0 %v89, 64
    %v426 = vpop.permute.xlu0 %425
    %v443 = vmul.f32 %v300, %v396
    %v444 = vmul.f32 %v303, %v398
    %v445 = vmul.f32 %v306, %v400
    %v446 = vmul.f32 %v309, %v402
    %v447 = vmul.f32 %v300, %v404
    %v448 = vmul.f32 %v303, %v406
    %v449 = vmul.f32 %v306, %v408
    %v450 = vmul.f32 %v309, %v410
    %v451 = vmul.f32 %v300, %v412
    %v452 = vmul.f32 %v303, %v414
    %v453 = vmul.f32 %v306, %v416
    %v454 = vmul.f32 %v309, %v418
    %v455 = vmul.f32 %v300, %v420
    %v456 = vmul.f32 %v303, %v422
    %v457 = vmul.f32 %v306, %v424
    %v458 = vmul.f32 %v309, %v426
    %475 = vrot.lane.b32.xlu0 %v379, 96
    %v476 = vpop.permute.xlu0 %475
    %477 = vrot.lane.b32.xlu0 %v380, 96
    %v478 = vpop.permute.xlu0 %477
    %479 = vrot.lane.b32.xlu0 %v381, 96
    %v480 = vpop.permute.xlu0 %479
    %481 = vrot.lane.b32.xlu0 %v382, 96
    %v482 = vpop.permute.xlu0 %481
    %483 = vrot.lane.b32.xlu0 %v383, 96
    %v484 = vpop.permute.xlu0 %483
    %485 = vrot.lane.b32.xlu0 %v384, 96
    %v486 = vpop.permute.xlu0 %485
    %487 = vrot.lane.b32.xlu0 %v385, 96
    %v488 = vpop.permute.xlu0 %487
    %489 = vrot.lane.b32.xlu0 %v386, 96
    %v490 = vpop.permute.xlu0 %489
    %491 = vrot.lane.b32.xlu0 %v387, 96
    %v492 = vpop.permute.xlu0 %491
    %493 = vrot.lane.b32.xlu0 %v388, 96
    %v494 = vpop.permute.xlu0 %493
    %495 = vrot.lane.b32.xlu0 %v389, 96
    %v496 = vpop.permute.xlu0 %495
    %497 = vrot.lane.b32.xlu0 %v390, 96
    %v498 = vpop.permute.xlu0 %497
    %499 = vrot.lane.b32.xlu0 %v391, 96
    %v500 = vpop.permute.xlu0 %499
    %501 = vrot.lane.b32.xlu0 %v392, 96
    %v502 = vpop.permute.xlu0 %501
    %503 = vrot.lane.b32.xlu0 %v393, 96
    %v504 = vpop.permute.xlu0 %503
    %505 = vrot.lane.b32.xlu0 %v394, 96
    %v506 = vpop.permute.xlu0 %505
    %v508 = vsel %vm163, %v311, 0
    %v511 = vsel %vm163, %v312, 0
    %v514 = vsel %vm163, %v313, 0
    %v517 = vsel %vm163, %v314, 0
    %v519 = vsel %vm163, %v476, 0
    %v521 = vsel %vm163, %v478, 0
    %v523 = vsel %vm163, %v480, 0
    %v525 = vsel %vm163, %v482, 0
    %v527 = vsel %vm163, %v484, 0
    %v529 = vsel %vm163, %v486, 0
    %v531 = vsel %vm163, %v488, 0
    %v533 = vsel %vm163, %v490, 0
    %v535 = vsel %vm163, %v492, 0
    %v537 = vsel %vm163, %v494, 0
    %v539 = vsel %vm163, %v496, 0
    %v541 = vsel %vm163, %v498, 0
    %v543 = vsel %vm163, %v500, 0
    %v545 = vsel %vm163, %v502, 0
    %v547 = vsel %vm163, %v504, 0
    %v549 = vsel %vm163, %v506, 0
    %551 = vmatpush.xpose.msra.mxu0 %v549
    %552 = vmatpush.xpose.msra.mxu0 %v547
    %553 = vmatpush.xpose.msra.mxu0 %v545
    %554 = vmatpush.xpose.msra.mxu0 %v543
    %555 = vmatpush.xpose.msra.mxu0 %v541
    %556 = vmatpush.xpose.msra.mxu0 %v539
    %557 = vmatpush.xpose.msra.mxu0 %v537
    %558 = vmatpush.xpose.msra.mxu0 %v535
    %559 = vmatpush.xpose.msra.mxu0 %v533
    %560 = vmatpush.xpose.msra.mxu0 %v531
    %561 = vmatpush.xpose.msra.mxu0 %v529
    %562 = vmatpush.xpose.msra.mxu0 %v527
    %563 = vmatpush.xpose.msra.mxu0 %v525
    %564 = vmatpush.xpose.msra.mxu0 %v523
    %565 = vmatpush.xpose.msra.mxu0 %v521
    %566 = vmatpush.xpose.msra.mxu0 %v519
    %567 = vmatmul.f32.gmra.mxu0 %v508
    %v568 = vpop.f32.mrf.mxu0
    %v569 = vadd.f32 %v70, %v568
    %570 = vmatmul.f32.gmra.mxu0 %v511
    %v571 = vpop.f32.mrf.mxu0
    %v572 = vadd.f32 %v71, %v571
    %573 = vmatmul.f32.gmra.mxu0 %v514
    %v574 = vpop.f32.mrf.mxu0
    %v575 = vadd.f32 %v72, %v574
    %576 = vmatmul.f32.gmra.mxu0 %v517
    %v577 = vpop.f32.mrf.mxu0
    %v578 = vadd.f32 %v73, %v577
    %579 = vdwg.mxu0
    %v580 = vperm.slane %v102, 0
    %v581 = vadd.f32 %v569, %v580
    %v582 = vadd.f32 %v572, %v580
    %v583 = vadd.f32 %v575, %v580
    %v584 = vadd.f32 %v578, %v580
    %585 = vmax.xlane.f32.xlu0 %v581
    %v586 = vpop.xlane.xlu0 %585
    %587 = vmax.xlane.f32.xlu0 %v582
    %v588 = vpop.xlane.xlu0 %587
    %589 = vmax.xlane.f32.xlu0 %v583
    %v590 = vpop.xlane.xlu0 %589
    %591 = vmax.xlane.f32.xlu0 %v584
    %v592 = vpop.xlane.xlu0 %591
    %v593 = vsub.f32 %v581, %v586
    %v594 = vsub.f32 %v582, %v588
    %v595 = vsub.f32 %v583, %v590
    %v596 = vsub.f32 %v584, %v592
    %v597 = vmul.f32 %v593, 1.442695
    %v598 = vpow.pop %v597
    %v599 = vmul.f32 %v594, 1.442695
    %v600 = vpow.pop %v599
    %v601 = vmul.f32 %v595, 1.442695
    %v602 = vpow.pop %v601
    %v603 = vmul.f32 %v596, 1.442695
    %v604 = vpow.pop %v603
    %621 = vrot.lane.b32.xlu0 %v443, 64
    %v622 = vpop.permute.xlu0 %621
    %623 = vrot.lane.b32.xlu0 %v444, 64
    %v624 = vpop.permute.xlu0 %623
    %625 = vrot.lane.b32.xlu0 %v445, 64
    %v626 = vpop.permute.xlu0 %625
    %627 = vrot.lane.b32.xlu0 %v446, 64
    %v628 = vpop.permute.xlu0 %627
    %629 = vrot.lane.b32.xlu0 %v447, 64
    %v630 = vpop.permute.xlu0 %629
    %631 = vrot.lane.b32.xlu0 %v448, 64
    %v632 = vpop.permute.xlu0 %631
    %633 = vrot.lane.b32.xlu0 %v449, 64
    %v634 = vpop.permute.xlu0 %633
    %635 = vrot.lane.b32.xlu0 %v450, 64
    %v636 = vpop.permute.xlu0 %635
    %637 = vrot.lane.b32.xlu0 %v451, 64
    %v638 = vpop.permute.xlu0 %637
    %639 = vrot.lane.b32.xlu0 %v452, 64
    %v640 = vpop.permute.xlu0 %639
    %641 = vrot.lane.b32.xlu0 %v453, 64
    %v642 = vpop.permute.xlu0 %641
    %643 = vrot.lane.b32.xlu0 %v454, 64
    %v644 = vpop.permute.xlu0 %643
    %645 = vrot.lane.b32.xlu0 %v455, 64
    %v646 = vpop.permute.xlu0 %645
    %647 = vrot.lane.b32.xlu0 %v456, 64
    %v648 = vpop.permute.xlu0 %647
    %649 = vrot.lane.b32.xlu0 %v457, 64
    %v650 = vpop.permute.xlu0 %649
    %651 = vrot.lane.b32.xlu0 %v458, 64
    %v652 = vpop.permute.xlu0 %651
    %669 = vmatpush.msra.mxu0 %v652
    %670 = vmatpush.msra.mxu0 %v650
    %671 = vmatpush.msra.mxu0 %v648
    %672 = vmatpush.msra.mxu0 %v646
    %673 = vmatpush.msra.mxu0 %v644
    %674 = vmatpush.msra.mxu0 %v642
    %675 = vmatpush.msra.mxu0 %v640
    %676 = vmatpush.msra.mxu0 %v638
    %677 = vmatpush.msra.mxu0 %v636
    %678 = vmatpush.msra.mxu0 %v634
    %679 = vmatpush.msra.mxu0 %v632
    %680 = vmatpush.msra.mxu0 %v630
    %681 = vmatpush.msra.mxu0 %v628
    %682 = vmatpush.msra.mxu0 %v626
    %683 = vmatpush.msra.mxu0 %v624
    %684 = vmatpush.msra.mxu0 %v622
    %685 = vmatmul.f32.gmra.mxu0 %v598
    %v686 = vpop.f32.mrf.mxu0
    %v687 = vadd.f32 0.0, %v686
    %688 = vmatmul.f32.gmra.mxu0 %v600
    %v689 = vpop.f32.mrf.mxu0
    %v690 = vadd.f32 0.0, %v689
    %691 = vmatmul.f32.gmra.mxu0 %v602
    %v692 = vpop.f32.mrf.mxu0
    %v693 = vadd.f32 0.0, %v692
    %694 = vmatmul.f32.gmra.mxu0 %v604
    %v695 = vpop.f32.mrf.mxu0
    %v696 = vadd.f32 0.0, %v695
    %697 = vdwg.mxu0
    %698 = vmatpush.msra.mxu0 %v89
    %699 = vmatpush.msra.mxu0 %v88
    %700 = vmatpush.msra.mxu0 %v87
    %701 = vmatpush.msra.mxu0 %v86
    %702 = vmatpush.msra.mxu0 %v85
    %703 = vmatpush.msra.mxu0 %v84
    %704 = vmatpush.msra.mxu0 %v83
    %705 = vmatpush.msra.mxu0 %v82
    %706 = vmatpush.msra.mxu0 %v81
    %707 = vmatpush.msra.mxu0 %v80
    %708 = vmatpush.msra.mxu0 %v79
    %709 = vmatpush.msra.mxu0 %v78
    %710 = vmatpush.msra.mxu0 %v77
    %711 = vmatpush.msra.mxu0 %v76
    %712 = vmatpush.msra.mxu0 %v75
    %713 = vmatpush.msra.mxu0 %v74
    %714 = vmatmul.f32.gmra.mxu0 %v598
    %v715 = vpop.f32.mrf.mxu0
    %v716 = vadd.f32 0.0, %v715
    %717 = vmatmul.f32.gmra.mxu0 %v600
    %v718 = vpop.f32.mrf.mxu0
    %v719 = vadd.f32 0.0, %v718
    %720 = vmatmul.f32.gmra.mxu0 %v602
    %v721 = vpop.f32.mrf.mxu0
    %v722 = vadd.f32 0.0, %v721
    %723 = vmatmul.f32.gmra.mxu0 %v604
    %v724 = vpop.f32.mrf.mxu0
    %v725 = vadd.f32 0.0, %v724
    %726 = vdwg.mxu0
    %v727 = vrcp.pop %v716
    %v728 = vrcp.pop %v719
    %v729 = vrcp.pop %v722
    %v730 = vrcp.pop %v725
    %v731 = vmul.f32 %v687, %v727
    %v732 = vmul.f32 %v690, %v728
    %v733 = vmul.f32 %v693, %v729
    %v734 = vmul.f32 %v696, %v730
    %v735 = vperm.slane %v93, 0
    %v737 = vsel %vm163, %v731, 0
    %v740 = vsel %vm163, %v732, 0
    %v743 = vsel %vm163, %v733, 0
    %v746 = vsel %vm163, %v734, 0
    %748 = vmatpush.msra.mxu0 0.0
    %749 = vmatpush.msra.mxu0 0.0
    %750 = vmatpush.msra.mxu0 0.0
    %751 = vmatpush.msra.mxu0 0.0
    %752 = vmatpush.msra.mxu0 0.0
    %753 = vmatpush.msra.mxu0 0.0
    %754 = vmatpush.msra.mxu0 0.0
    %755 = vmatpush.msra.mxu0 0.0
    %756 = vmatpush.msra.mxu0 0.0
    %757 = vmatpush.msra.mxu0 0.0
    %758 = vmatpush.msra.mxu0 0.0
    %759 = vmatpush.msra.mxu0 0.0
    %760 = vmatpush.msra.mxu0 %v53
    %761 = vmatpush.msra.mxu0 %v52
    %762 = vmatpush.msra.mxu0 %v51
    %763 = vmatpush.msra.mxu0 %v50
    %764 = vmatmul.f32.gmra.mxu0 %v737
    %v765 = vpop.f32.mrf.mxu0
    %v766 = vadd.f32 %v735, %v765
    %767 = vmatmul.f32.gmra.mxu0 %v740
    %v768 = vpop.f32.mrf.mxu0
    %v769 = vadd.f32 %v735, %v768
    %770 = vmatmul.f32.gmra.mxu0 %v743
    %v771 = vpop.f32.mrf.mxu0
    %v772 = vadd.f32 %v735, %v771
    %773 = vmatmul.f32.gmra.mxu0 %v746
    %v774 = vpop.f32.mrf.mxu0
    %v775 = vadd.f32 %v735, %v774
    %776 = vdwg.mxu0
    %v777 = vadd.f32 %v265, %v766
    %v778 = vadd.f32 %v266, %v769
    %v779 = vadd.f32 %v267, %v772
    %v780 = vadd.f32 %v268, %v775
    %v781 = vsel %vm163, %v777, 0.0
    %782 = vadd.xlane.f32.xlu0 %v781
    %v783 = vpop.xlane.xlu0 %782
    %v784 = vsel %vm163, %v778, 0.0
    %785 = vadd.xlane.f32.xlu0 %v784
    %v786 = vpop.xlane.xlu0 %785
    %v787 = vsel %vm163, %v779, 0.0
    %788 = vadd.xlane.f32.xlu0 %v787
    %v789 = vpop.xlane.xlu0 %788
    %v790 = vsel %vm163, %v780, 0.0
    %791 = vadd.xlane.f32.xlu0 %v790
    %v792 = vpop.xlane.xlu0 %791
    %v793 = vmul.f32 %v783, %v182
    %v794 = vmul.f32 %v786, %v182
    %v795 = vmul.f32 %v789, %v182
    %v796 = vmul.f32 %v792, %v182
    %v797 = vsub.f32 %v777, %v793
    %v798 = vsub.f32 %v778, %v794
    %v799 = vsub.f32 %v779, %v795
    %v800 = vsub.f32 %v780, %v796
    %v801 = vmul.f32 %v797, %v797
    %v802 = vmul.f32 %v798, %v798
    %v803 = vmul.f32 %v799, %v799
    %v804 = vmul.f32 %v800, %v800
    %v805 = vsel %vm163, %v801, 0.0
    %806 = vadd.xlane.f32.xlu0 %v805
    %v807 = vpop.xlane.xlu0 %806
    %v808 = vsel %vm163, %v802, 0.0
    %809 = vadd.xlane.f32.xlu0 %v808
    %v810 = vpop.xlane.xlu0 %809
    %v811 = vsel %vm163, %v803, 0.0
    %812 = vadd.xlane.f32.xlu0 %v811
    %v813 = vpop.xlane.xlu0 %812
    %v814 = vsel %vm163, %v804, 0.0
    %815 = vadd.xlane.f32.xlu0 %v814
    %v816 = vpop.xlane.xlu0 %815
    %v817 = vmul.f32 %v807, %v182
    %v818 = vmul.f32 %v810, %v182
    %v819 = vmul.f32 %v813, %v182
    %v820 = vmul.f32 %v816, %v182
    %v821 = vadd.f32 %v817, 1e-12
    %v822 = vadd.f32 %v818, 1e-12
    %v823 = vadd.f32 %v819, 1e-12
    %v824 = vadd.f32 %v820, 1e-12
    %v825 = vrsqrt.pop %v821
    %v826 = vmul.f32 %v825, %v821
    %v827 = vmul.f32 %v826, %v825
    %v828 = vmul.f32 0.5, %v827
    %v829 = vsub.f32 1.5, %v828
    %v830 = vmul.f32 %v825, %v829
    %vm831 = vweird.f32 %v821
    %vm832 = vweird.f32 %v825
    %vm833 = vmor %vm831, %vm832
    %v834 = vsel %vm833, %v825, %v830
    %v835 = vrsqrt.pop %v822
    %v836 = vmul.f32 %v835, %v822
    %v837 = vmul.f32 %v836, %v835
    %v838 = vmul.f32 0.5, %v837
    %v839 = vsub.f32 1.5, %v838
    %v840 = vmul.f32 %v835, %v839
    %vm841 = vweird.f32 %v822
    %vm842 = vweird.f32 %v835
    %vm843 = vmor %vm841, %vm842
    %v844 = vsel %vm843, %v835, %v840
    %v845 = vrsqrt.pop %v823
    %v846 = vmul.f32 %v845, %v823
    %v847 = vmul.f32 %v846, %v845
    %v848 = vmul.f32 0.5, %v847
    %v849 = vsub.f32 1.5, %v848
    %v850 = vmul.f32 %v845, %v849
    %vm851 = vweird.f32 %v823
    %vm852 = vweird.f32 %v845
    %vm853 = vmor %vm851, %vm852
    %v854 = vsel %vm853, %v845, %v850
    %v855 = vrsqrt.pop %v824
    %v856 = vmul.f32 %v855, %v824
    %v857 = vmul.f32 %v856, %v855
    %v858 = vmul.f32 0.5, %v857
    %v859 = vsub.f32 1.5, %v858
    %v860 = vmul.f32 %v855, %v859
    %vm861 = vweird.f32 %v824
    %vm862 = vweird.f32 %v855
    %vm863 = vmor %vm861, %vm862
    %v864 = vsel %vm863, %v855, %v860
    %v865 = vmul.f32 %v797, %v834
    %v866 = vmul.f32 %v798, %v844
    %v867 = vmul.f32 %v799, %v854
    %v868 = vmul.f32 %v800, %v864
    %v869 = vperm.slane %v94, 0
    %v870 = vmul.f32 %v865, %v869
    %v871 = vmul.f32 %v866, %v869
    %v872 = vmul.f32 %v867, %v869
    %v873 = vmul.f32 %v868, %v869
    %v874 = vperm.slane %v95, 0
    %v875 = vadd.f32 %v870, %v874
    %v876 = vadd.f32 %v871, %v874
    %v877 = vadd.f32 %v872, %v874
    %v878 = vadd.f32 %v873, %v874
    %v879 = vperm.slane %v96, 0
    %v881 = vsel %vm163, %v875, 0
    %v884 = vsel %vm163, %v876, 0
    %v887 = vsel %vm163, %v877, 0
    %v890 = vsel %vm163, %v878, 0
    %892 = vmatpush.msra.mxu0 0.0
    %893 = vmatpush.msra.mxu0 0.0
    %894 = vmatpush.msra.mxu0 0.0
    %895 = vmatpush.msra.mxu0 0.0
    %896 = vmatpush.msra.mxu0 0.0
    %897 = vmatpush.msra.mxu0 0.0
    %898 = vmatpush.msra.mxu0 0.0
    %899 = vmatpush.msra.mxu0 0.0
    %900 = vmatpush.msra.mxu0 0.0
    %901 = vmatpush.msra.mxu0 0.0
    %902 = vmatpush.msra.mxu0 0.0
    %903 = vmatpush.msra.mxu0 0.0
    %904 = vmatpush.msra.mxu0 %v57
    %905 = vmatpush.msra.mxu0 %v56
    %906 = vmatpush.msra.mxu0 %v55
    %907 = vmatpush.msra.mxu0 %v54
    %908 = vmatmul.f32.gmra.mxu0 %v881
    %v909 = vpop.f32.mrf.mxu0
    %v910 = vadd.f32 %v879, %v909
    %911 = vmatmul.f32.gmra.mxu0 %v884
    %v912 = vpop.f32.mrf.mxu0
    %v913 = vadd.f32 %v879, %v912
    %914 = vmatmul.f32.gmra.mxu0 %v887
    %v915 = vpop.f32.mrf.mxu0
    %v916 = vadd.f32 %v879, %v915
    %917 = vmatmul.f32.gmra.mxu0 %v890
    %v918 = vpop.f32.mrf.mxu0
    %v919 = vadd.f32 %v879, %v918
    %920 = vdwg.mxu0
    %v921 = vmul.f32 %v910, 0.5
    %v922 = vmul.f32 %v913, 0.5
    %v923 = vmul.f32 %v916, 0.5
    %v924 = vmul.f32 %v919, 0.5
    %v925 = vmul.f32 %v910, 0.044715
    %v926 = vmul.f32 %v913, 0.044715
    %v927 = vmul.f32 %v916, 0.044715
    %v928 = vmul.f32 %v919, 0.044715
    %v929 = vmul.f32 %v925, %v910
    %v930 = vmul.f32 %v926, %v913
    %v931 = vmul.f32 %v927, %v916
    %v932 = vmul.f32 %v928, %v919
    %v933 = vmul.f32 %v929, %v910
    %v934 = vmul.f32 %v930, %v913
    %v935 = vmul.f32 %v931, %v916
    %v936 = vmul.f32 %v932, %v919
    %v937 = vadd.f32 %v910, %v933
    %v938 = vadd.f32 %v913, %v934
    %v939 = vadd.f32 %v916, %v935
    %v940 = vadd.f32 %v919, %v936
    %v941 = vmul.f32 %v937, 0.7978846
    %v942 = vmul.f32 %v938, 0.7978846
    %v943 = vmul.f32 %v939, 0.7978846
    %v944 = vmul.f32 %v940, 0.7978846
    %v945 = vtanh.pop %v941
    %v946 = vtanh.pop %v942
    %v947 = vtanh.pop %v943
    %v948 = vtanh.pop %v944
    %v949 = vadd.f32 %v945, 1.0
    %v950 = vadd.f32 %v946, 1.0
    %v951 = vadd.f32 %v947, 1.0
    %v952 = vadd.f32 %v948, 1.0
    %v953 = vmul.f32 %v921, %v949
    %v954 = vmul.f32 %v922, %v950
    %v955 = vmul.f32 %v923, %v951
    %v956 = vmul.f32 %v924, %v952
    %v957 = vperm.slane %v97, 0
    %vm958 = vcmask 523264
    %v960 = vsel %vm958, %v953, 0
    %v963 = vsel %vm958, %v954, 0
    %v966 = vsel %vm958, %v955, 0
    %v969 = vsel %vm958, %v956, 0
    %971 = vmatpush.msra.mxu0 0.0
    %972 = vmatpush.msra.mxu0 0.0
    %973 = vmatpush.msra.mxu0 0.0
    %974 = vmatpush.msra.mxu0 0.0
    %975 = vmatpush.msra.mxu0 0.0
    %976 = vmatpush.msra.mxu0 0.0
    %977 = vmatpush.msra.mxu0 0.0
    %978 = vmatpush.msra.mxu0 0.0
    %979 = vmatpush.msra.mxu0 %v65
    %980 = vmatpush.msra.mxu0 %v64
    %981 = vmatpush.msra.mxu0 %v63
    %982 = vmatpush.msra.mxu0 %v62
    %983 = vmatpush.msra.mxu0 %v61
    %984 = vmatpush.msra.mxu0 %v60
    %985 = vmatpush.msra.mxu0 %v59
    %986 = vmatpush.msra.mxu0 %v58
    %987 = vmatmul.f32.gmra.mxu0 %v960
    %v988 = vpop.f32.mrf.mxu0
    %v989 = vadd.f32 %v957, %v988
    %990 = vmatmul.f32.gmra.mxu0 %v963
    %v991 = vpop.f32.mrf.mxu0
    %v992 = vadd.f32 %v957, %v991
    %993 = vmatmul.f32.gmra.mxu0 %v966
    %v994 = vpop.f32.mrf.mxu0
    %v995 = vadd.f32 %v957, %v994
    %996 = vmatmul.f32.gmra.mxu0 %v969
    %v997 = vpop.f32.mrf.mxu0
    %v998 = vadd.f32 %v957, %v997
    %999 = vdwg.mxu0
    %v1000 = vadd.f32 %v875, %v989
    %v1001 = vadd.f32 %v876, %v992
    %v1002 = vadd.f32 %v877, %v995
    %v1003 = vadd.f32 %v878, %v998
    %v1004 = vsel %vm163, %v1000, 0.0
    %1005 = vadd.xlane.f32.xlu0 %v1004
    %v1006 = vpop.xlane.xlu0 %1005
    %v1007 = vsel %vm163, %v1001, 0.0
    %1008 = vadd.xlane.f32.xlu0 %v1007
    %v1009 = vpop.xlane.xlu0 %1008
    %v1010 = vsel %vm163, %v1002, 0.0
    %1011 = vadd.xlane.f32.xlu0 %v1010
    %v1012 = vpop.xlane.xlu0 %1011
    %v1013 = vsel %vm163, %v1003, 0.0
    %1014 = vadd.xlane.f32.xlu0 %v1013
    %v1015 = vpop.xlane.xlu0 %1014
    %v1016 = vmul.f32 %v1006, %v182
    %v1017 = vmul.f32 %v1009, %v182
    %v1018 = vmul.f32 %v1012, %v182
    %v1019 = vmul.f32 %v1015, %v182
    %v1020 = vsub.f32 %v1000, %v1016
    %v1021 = vsub.f32 %v1001, %v1017
    %v1022 = vsub.f32 %v1002, %v1018
    %v1023 = vsub.f32 %v1003, %v1019
    %v1024 = vmul.f32 %v1020, %v1020
    %v1025 = vmul.f32 %v1021, %v1021
    %v1026 = vmul.f32 %v1022, %v1022
    %v1027 = vmul.f32 %v1023, %v1023
    %v1028 = vsel %vm163, %v1024, 0.0
    %1029 = vadd.xlane.f32.xlu0 %v1028
    %v1030 = vpop.xlane.xlu0 %1029
    %v1031 = vsel %vm163, %v1025, 0.0
    %1032 = vadd.xlane.f32.xlu0 %v1031
    %v1033 = vpop.xlane.xlu0 %1032
    %v1034 = vsel %vm163, %v1026, 0.0
    %1035 = vadd.xlane.f32.xlu0 %v1034
    %v1036 = vpop.xlane.xlu0 %1035
    %v1037 = vsel %vm163, %v1027, 0.0
    %1038 = vadd.xlane.f32.xlu0 %v1037
    %v1039 = vpop.xlane.xlu0 %1038
    %v1040 = vmul.f32 %v1030, %v182
    %v1041 = vmul.f32 %v1033, %v182
    %v1042 = vmul.f32 %v1036, %v182
    %v1043 = vmul.f32 %v1039, %v182
    %v1044 = vadd.f32 %v1040, 1e-12
    %v1045 = vadd.f32 %v1041, 1e-12
    %v1046 = vadd.f32 %v1042, 1e-12
    %v1047 = vadd.f32 %v1043, 1e-12
    %v1048 = vrsqrt.pop %v1044
    %v1049 = vmul.f32 %v1048, %v1044
    %v1050 = vmul.f32 %v1049, %v1048
    %v1051 = vmul.f32 0.5, %v1050
    %v1052 = vsub.f32 1.5, %v1051
    %v1053 = vmul.f32 %v1048, %v1052
    %vm1054 = vweird.f32 %v1044
    %vm1055 = vweird.f32 %v1048
    %vm1056 = vmor %vm1054, %vm1055
    %v1057 = vsel %vm1056, %v1048, %v1053
    %v1058 = vrsqrt.pop %v1045
    %v1059 = vmul.f32 %v1058, %v1045
    %v1060 = vmul.f32 %v1059, %v1058
    %v1061 = vmul.f32 0.5, %v1060
    %v1062 = vsub.f32 1.5, %v1061
    %v1063 = vmul.f32 %v1058, %v1062
    %vm1064 = vweird.f32 %v1045
    %vm1065 = vweird.f32 %v1058
    %vm1066 = vmor %vm1064, %vm1065
    %v1067 = vsel %vm1066, %v1058, %v1063
    %v1068 = vrsqrt.pop %v1046
    %v1069 = vmul.f32 %v1068, %v1046
    %v1070 = vmul.f32 %v1069, %v1068
    %v1071 = vmul.f32 0.5, %v1070
    %v1072 = vsub.f32 1.5, %v1071
    %v1073 = vmul.f32 %v1068, %v1072
    %vm1074 = vweird.f32 %v1046
    %vm1075 = vweird.f32 %v1068
    %vm1076 = vmor %vm1074, %vm1075
    %v1077 = vsel %vm1076, %v1068, %v1073
    %v1078 = vrsqrt.pop %v1047
    %v1079 = vmul.f32 %v1078, %v1047
    %v1080 = vmul.f32 %v1079, %v1078
    %v1081 = vmul.f32 0.5, %v1080
    %v1082 = vsub.f32 1.5, %v1081
    %v1083 = vmul.f32 %v1078, %v1082
    %vm1084 = vweird.f32 %v1047
    %vm1085 = vweird.f32 %v1078
    %vm1086 = vmor %vm1084, %vm1085
    %v1087 = vsel %vm1086, %v1078, %v1083
    %v1088 = vmul.f32 %v1020, %v1057
    %v1089 = vmul.f32 %v1021, %v1067
    %v1090 = vmul.f32 %v1022, %v1077
    %v1091 = vmul.f32 %v1023, %v1087
    %v1092 = vperm.slane %v98, 0
    %v1093 = vmul.f32 %v1088, %v1092
    %v1094 = vmul.f32 %v1089, %v1092
    %v1095 = vmul.f32 %v1090, %v1092
    %v1096 = vmul.f32 %v1091, %v1092
    %v1097 = vperm.slane %v99, 0
    %v1098 = vadd.f32 %v1093, %v1097
    %v1099 = vadd.f32 %v1094, %v1097
    %v1100 = vadd.f32 %v1095, %v1097
    %v1101 = vadd.f32 %v1096, %v1097
    %v1103 = vsel %vm163, %v1098, 0
    %v1106 = vsel %vm163, %v1099, 0
    %v1109 = vsel %vm163, %v1100, 0
    %v1112 = vsel %vm163, %v1101, 0
    %1114 = vmatpush.msra.mxu0 0.0
    %1115 = vmatpush.msra.mxu0 0.0
    %1116 = vmatpush.msra.mxu0 0.0
    %1117 = vmatpush.msra.mxu0 0.0
    %1118 = vmatpush.msra.mxu0 0.0
    %1119 = vmatpush.msra.mxu0 0.0
    %1120 = vmatpush.msra.mxu0 0.0
    %1121 = vmatpush.msra.mxu0 0.0
    %1122 = vmatpush.msra.mxu0 0.0
    %1123 = vmatpush.msra.mxu0 0.0
    %1124 = vmatpush.msra.mxu0 0.0
    %1125 = vmatpush.msra.mxu0 0.0
    %1126 = vmatpush.msra.mxu0 %v49
    %1127 = vmatpush.msra.mxu0 %v48
    %1128 = vmatpush.msra.mxu0 %v47
    %1129 = vmatpush.msra.mxu0 %v46
    %1130 = vmatmul.f32.gmra.mxu0 %v1103
    %v1131 = vpop.f32.mrf.mxu0
    %v1132 = vadd.f32 %v269, %v1131
    %1133 = vmatmul.f32.gmra.mxu0 %v1106
    %v1134 = vpop.f32.mrf.mxu0
    %v1135 = vadd.f32 %v269, %v1134
    %1136 = vmatmul.f32.gmra.mxu0 %v1109
    %v1137 = vpop.f32.mrf.mxu0
    %v1138 = vadd.f32 %v269, %v1137
    %1139 = vmatmul.f32.gmra.mxu0 %v1112
    %v1140 = vpop.f32.mrf.mxu0
    %v1141 = vadd.f32 %v269, %v1140
    %1142 = vdwg.mxu0
    %v1143 = vmul.f32 %v1132, 0.35355338
    %v1144 = vmul.f32 %v1135, 0.35355338
    %v1145 = vmul.f32 %v1138, 0.35355338
    %v1146 = vmul.f32 %v1141, 0.35355338
    %v1147 = vmul.f32 %v1132, %v332
    %v1148 = vmul.f32 %v1135, %v334
    %v1149 = vmul.f32 %v1138, %v336
    %v1150 = vmul.f32 %v1141, %v338
    %v1151 = vmul.f32 %v1132, %v340
    %v1152 = vmul.f32 %v1135, %v342
    %v1153 = vmul.f32 %v1138, %v344
    %v1154 = vmul.f32 %v1141, %v346
    %v1155 = vmul.f32 %v1132, %v348
    %v1156 = vmul.f32 %v1135, %v350
    %v1157 = vmul.f32 %v1138, %v352
    %v1158 = vmul.f32 %v1141, %v354
    %v1159 = vmul.f32 %v1132, %v356
    %v1160 = vmul.f32 %v1135, %v358
    %v1161 = vmul.f32 %v1138, %v360
    %v1162 = vmul.f32 %v1141, %v362
    %v1163 = vmul.f32 %v1132, %v396
    %v1164 = vmul.f32 %v1135, %v398
    %v1165 = vmul.f32 %v1138, %v400
    %v1166 = vmul.f32 %v1141, %v402
    %v1167 = vmul.f32 %v1132, %v404
    %v1168 = vmul.f32 %v1135, %v406
    %v1169 = vmul.f32 %v1138, %v408
    %v1170 = vmul.f32 %v1141, %v410
    %v1171 = vmul.f32 %v1132, %v412
    %v1172 = vmul.f32 %v1135, %v414
    %v1173 = vmul.f32 %v1138, %v416
    %v1174 = vmul.f32 %v1141, %v418
    %v1175 = vmul.f32 %v1132, %v420
    %v1176 = vmul.f32 %v1135, %v422
    %v1177 = vmul.f32 %v1138, %v424
    %v1178 = vmul.f32 %v1141, %v426
    %1195 = vrot.lane.b32.xlu0 %v1147, 96
    %v1196 = vpop.permute.xlu0 %1195
    %1197 = vrot.lane.b32.xlu0 %v1148, 96
    %v1198 = vpop.permute.xlu0 %1197
    %1199 = vrot.lane.b32.xlu0 %v1149, 96
    %v1200 = vpop.permute.xlu0 %1199
    %1201 = vrot.lane.b32.xlu0 %v1150, 96
    %v1202 = vpop.permute.xlu0 %1201
    %1203 = vrot.lane.b32.xlu0 %v1151, 96
    %v1204 = vpop.permute.xlu0 %1203
    %1205 = vrot.lane.b32.xlu0 %v1152, 96
    %v1206 = vpop.permute.xlu0 %1205
    %1207 = vrot.lane.b32.xlu0 %v1153, 96
    %v1208 = vpop.permute.xlu0 %1207
    %1209 = vrot.lane.b32.xlu0 %v1154, 96
    %v1210 = vpop.permute.xlu0 %1209
    %1211 = vrot.lane.b32.xlu0 %v1155, 96
    %v1212 = vpop.permute.xlu0 %1211
    %1213 = vrot.lane.b32.xlu0 %v1156, 96
    %v1214 = vpop.permute.xlu0 %1213
    %1215 = vrot.lane.b32.xlu0 %v1157, 96
    %v1216 = vpop.permute.xlu0 %1215
    %1217 = vrot.lane.b32.xlu0 %v1158, 96
    %v1218 = vpop.permute.xlu0 %1217
    %1219 = vrot.lane.b32.xlu0 %v1159, 96
    %v1220 = vpop.permute.xlu0 %1219
    %1221 = vrot.lane.b32.xlu0 %v1160, 96
    %v1222 = vpop.permute.xlu0 %1221
    %1223 = vrot.lane.b32.xlu0 %v1161, 96
    %v1224 = vpop.permute.xlu0 %1223
    %1225 = vrot.lane.b32.xlu0 %v1162, 96
    %v1226 = vpop.permute.xlu0 %1225
    %v1228 = vsel %vm163, %v1143, 0
    %v1231 = vsel %vm163, %v1144, 0
    %v1234 = vsel %vm163, %v1145, 0
    %v1237 = vsel %vm163, %v1146, 0
    %v1239 = vsel %vm163, %v1196, 0
    %v1241 = vsel %vm163, %v1198, 0
    %v1243 = vsel %vm163, %v1200, 0
    %v1245 = vsel %vm163, %v1202, 0
    %v1247 = vsel %vm163, %v1204, 0
    %v1249 = vsel %vm163, %v1206, 0
    %v1251 = vsel %vm163, %v1208, 0
    %v1253 = vsel %vm163, %v1210, 0
    %v1255 = vsel %vm163, %v1212, 0
    %v1257 = vsel %vm163, %v1214, 0
    %v1259 = vsel %vm163, %v1216, 0
    %v1261 = vsel %vm163, %v1218, 0
    %v1263 = vsel %vm163, %v1220, 0
    %v1265 = vsel %vm163, %v1222, 0
    %v1267 = vsel %vm163, %v1224, 0
    %v1269 = vsel %vm163, %v1226, 0
    %1271 = vmatpush.xpose.msra.mxu0 %v1269
    %1272 = vmatpush.xpose.msra.mxu0 %v1267
    %1273 = vmatpush.xpose.msra.mxu0 %v1265
    %1274 = vmatpush.xpose.msra.mxu0 %v1263
    %1275 = vmatpush.xpose.msra.mxu0 %v1261
    %1276 = vmatpush.xpose.msra.mxu0 %v1259
    %1277 = vmatpush.xpose.msra.mxu0 %v1257
    %1278 = vmatpush.xpose.msra.mxu0 %v1255
    %1279 = vmatpush.xpose.msra.mxu0 %v1253
    %1280 = vmatpush.xpose.msra.mxu0 %v1251
    %1281 = vmatpush.xpose.msra.mxu0 %v1249
    %1282 = vmatpush.xpose.msra.mxu0 %v1247
    %1283 = vmatpush.xpose.msra.mxu0 %v1245
    %1284 = vmatpush.xpose.msra.mxu0 %v1243
    %1285 = vmatpush.xpose.msra.mxu0 %v1241
    %1286 = vmatpush.xpose.msra.mxu0 %v1239
    %1287 = vmatmul.f32.gmra.mxu0 %v1228
    %v1288 = vpop.f32.mrf.mxu0
    %v1289 = vadd.f32 %v70, %v1288
    %1290 = vmatmul.f32.gmra.mxu0 %v1231
    %v1291 = vpop.f32.mrf.mxu0
    %v1292 = vadd.f32 %v71, %v1291
    %1293 = vmatmul.f32.gmra.mxu0 %v1234
    %v1294 = vpop.f32.mrf.mxu0
    %v1295 = vadd.f32 %v72, %v1294
    %1296 = vmatmul.f32.gmra.mxu0 %v1237
    %v1297 = vpop.f32.mrf.mxu0
    %v1298 = vadd.f32 %v73, %v1297
    %1299 = vdwg.mxu0
    %v1300 = vadd.f32 %v1289, %v580
    %v1301 = vadd.f32 %v1292, %v580
    %v1302 = vadd.f32 %v1295, %v580
    %v1303 = vadd.f32 %v1298, %v580
    %1304 = vmax.xlane.f32.xlu0 %v1300
    %v1305 = vpop.xlane.xlu0 %1304
    %1306 = vmax.xlane.f32.xlu0 %v1301
    %v1307 = vpop.xlane.xlu0 %1306
    %1308 = vmax.xlane.f32.xlu0 %v1302
    %v1309 = vpop.xlane.xlu0 %1308
    %1310 = vmax.xlane.f32.xlu0 %v1303
    %v1311 = vpop.xlane.xlu0 %1310
    %v1312 = vsub.f32 %v1300, %v1305
    %v1313 = vsub.f32 %v1301, %v1307
    %v1314 = vsub.f32 %v1302, %v1309
    %v1315 = vsub.f32 %v1303, %v1311
    %v1316 = vmul.f32 %v1312, 1.442695
    %v1317 = vpow.pop %v1316
    %v1318 = vmul.f32 %v1313, 1.442695
    %v1319 = vpow.pop %v1318
    %v1320 = vmul.f32 %v1314, 1.442695
    %v1321 = vpow.pop %v1320
    %v1322 = vmul.f32 %v1315, 1.442695
    %v1323 = vpow.pop %v1322
    %1340 = vrot.lane.b32.xlu0 %v1163, 64
    %v1341 = vpop.permute.xlu0 %1340
    %1342 = vrot.lane.b32.xlu0 %v1164, 64
    %v1343 = vpop.permute.xlu0 %1342
    %1344 = vrot.lane.b32.xlu0 %v1165, 64
    %v1345 = vpop.permute.xlu0 %1344
    %1346 = vrot.lane.b32.xlu0 %v1166, 64
    %v1347 = vpop.permute.xlu0 %1346
    %1348 = vrot.lane.b32.xlu0 %v1167, 64
    %v1349 = vpop.permute.xlu0 %1348
    %1350 = vrot.lane.b32.xlu0 %v1168, 64
    %v1351 = vpop.permute.xlu0 %1350
    %1352 = vrot.lane.b32.xlu0 %v1169, 64
    %v1353 = vpop.permute.xlu0 %1352
    %1354 = vrot.lane.b32.xlu0 %v1170, 64
    %v1355 = vpop.permute.xlu0 %1354
    %1356 = vrot.lane.b32.xlu0 %v1171, 64
    %v1357 = vpop.permute.xlu0 %1356
    %1358 = vrot.lane.b32.xlu0 %v1172, 64
    %v1359 = vpop.permute.xlu0 %1358
    %1360 = vrot.lane.b32.xlu0 %v1173, 64
    %v1361 = vpop.permute.xlu0 %1360
    %1362 = vrot.lane.b32.xlu0 %v1174, 64
    %v1363 = vpop.permute.xlu0 %1362
    %1364 = vrot.lane.b32.xlu0 %v1175, 64
    %v1365 = vpop.permute.xlu0 %1364
    %1366 = vrot.lane.b32.xlu0 %v1176, 64
    %v1367 = vpop.permute.xlu0 %1366
    %1368 = vrot.lane.b32.xlu0 %v1177, 64
    %v1369 = vpop.permute.xlu0 %1368
    %1370 = vrot.lane.b32.xlu0 %v1178, 64
    %v1371 = vpop.permute.xlu0 %1370
    %1388 = vmatpush.msra.mxu0 %v1371
    %1389 = vmatpush.msra.mxu0 %v1369
    %1390 = vmatpush.msra.mxu0 %v1367
    %1391 = vmatpush.msra.mxu0 %v1365
    %1392 = vmatpush.msra.mxu0 %v1363
    %1393 = vmatpush.msra.mxu0 %v1361
    %1394 = vmatpush.msra.mxu0 %v1359
    %1395 = vmatpush.msra.mxu0 %v1357
    %1396 = vmatpush.msra.mxu0 %v1355
    %1397 = vmatpush.msra.mxu0 %v1353
    %1398 = vmatpush.msra.mxu0 %v1351
    %1399 = vmatpush.msra.mxu0 %v1349
    %1400 = vmatpush.msra.mxu0 %v1347
    %1401 = vmatpush.msra.mxu0 %v1345
    %1402 = vmatpush.msra.mxu0 %v1343
    %1403 = vmatpush.msra.mxu0 %v1341
    %1404 = vmatmul.f32.gmra.mxu0 %v1317
    %v1405 = vpop.f32.mrf.mxu0
    %v1406 = vadd.f32 0.0, %v1405
    %1407 = vmatmul.f32.gmra.mxu0 %v1319
    %v1408 = vpop.f32.mrf.mxu0
    %v1409 = vadd.f32 0.0, %v1408
    %1410 = vmatmul.f32.gmra.mxu0 %v1321
    %v1411 = vpop.f32.mrf.mxu0
    %v1412 = vadd.f32 0.0, %v1411
    %1413 = vmatmul.f32.gmra.mxu0 %v1323
    %v1414 = vpop.f32.mrf.mxu0
    %v1415 = vadd.f32 0.0, %v1414
    %1416 = vdwg.mxu0
    %1417 = vmatpush.msra.mxu0 %v89
    %1418 = vmatpush.msra.mxu0 %v88
    %1419 = vmatpush.msra.mxu0 %v87
    %1420 = vmatpush.msra.mxu0 %v86
    %1421 = vmatpush.msra.mxu0 %v85
    %1422 = vmatpush.msra.mxu0 %v84
    %1423 = vmatpush.msra.mxu0 %v83
    %1424 = vmatpush.msra.mxu0 %v82
    %1425 = vmatpush.msra.mxu0 %v81
    %1426 = vmatpush.msra.mxu0 %v80
    %1427 = vmatpush.msra.mxu0 %v79
    %1428 = vmatpush.msra.mxu0 %v78
    %1429 = vmatpush.msra.mxu0 %v77
    %1430 = vmatpush.msra.mxu0 %v76
    %1431 = vmatpush.msra.mxu0 %v75
    %1432 = vmatpush.msra.mxu0 %v74
    %1433 = vmatmul.f32.gmra.mxu0 %v1317
    %v1434 = vpop.f32.mrf.mxu0
    %v1435 = vadd.f32 0.0, %v1434
    %1436 = vmatmul.f32.gmra.mxu0 %v1319
    %v1437 = vpop.f32.mrf.mxu0
    %v1438 = vadd.f32 0.0, %v1437
    %1439 = vmatmul.f32.gmra.mxu0 %v1321
    %v1440 = vpop.f32.mrf.mxu0
    %v1441 = vadd.f32 0.0, %v1440
    %1442 = vmatmul.f32.gmra.mxu0 %v1323
    %v1443 = vpop.f32.mrf.mxu0
    %v1444 = vadd.f32 0.0, %v1443
    %1445 = vdwg.mxu0
    %v1446 = vrcp.pop %v1435
    %v1447 = vrcp.pop %v1438
    %v1448 = vrcp.pop %v1441
    %v1449 = vrcp.pop %v1444
    %v1450 = vmul.f32 %v1406, %v1446
    %v1451 = vmul.f32 %v1409, %v1447
    %v1452 = vmul.f32 %v1412, %v1448
    %v1453 = vmul.f32 %v1415, %v1449
    %v1455 = vsel %vm163, %v1450, 0
    %v1458 = vsel %vm163, %v1451, 0
    %v1461 = vsel %vm163, %v1452, 0
    %v1464 = vsel %vm163, %v1453, 0
    %1466 = vmatpush.msra.mxu0 0.0
    %1467 = vmatpush.msra.mxu0 0.0
    %1468 = vmatpush.msra.mxu0 0.0
    %1469 = vmatpush.msra.mxu0 0.0
    %1470 = vmatpush.msra.mxu0 0.0
    %1471 = vmatpush.msra.mxu0 0.0
    %1472 = vmatpush.msra.mxu0 0.0
    %1473 = vmatpush.msra.mxu0 0.0
    %1474 = vmatpush.msra.mxu0 0.0
    %1475 = vmatpush.msra.mxu0 0.0
    %1476 = vmatpush.msra.mxu0 0.0
    %1477 = vmatpush.msra.mxu0 0.0
    %1478 = vmatpush.msra.mxu0 %v53
    %1479 = vmatpush.msra.mxu0 %v52
    %1480 = vmatpush.msra.mxu0 %v51
    %1481 = vmatpush.msra.mxu0 %v50
    %1482 = vmatmul.f32.gmra.mxu0 %v1455
    %v1483 = vpop.f32.mrf.mxu0
    %v1484 = vadd.f32 %v735, %v1483
    %1485 = vmatmul.f32.gmra.mxu0 %v1458
    %v1486 = vpop.f32.mrf.mxu0
    %v1487 = vadd.f32 %v735, %v1486
    %1488 = vmatmul.f32.gmra.mxu0 %v1461
    %v1489 = vpop.f32.mrf.mxu0
    %v1490 = vadd.f32 %v735, %v1489
    %1491 = vmatmul.f32.gmra.mxu0 %v1464
    %v1492 = vpop.f32.mrf.mxu0
    %v1493 = vadd.f32 %v735, %v1492
    %1494 = vdwg.mxu0
    %v1495 = vadd.f32 %v1098, %v1484
    %v1496 = vadd.f32 %v1099, %v1487
    %v1497 = vadd.f32 %v1100, %v1490
    %v1498 = vadd.f32 %v1101, %v1493
    %v1499 = vsel %vm163, %v1495, 0.0
    %1500 = vadd.xlane.f32.xlu0 %v1499
    %v1501 = vpop.xlane.xlu0 %1500
    %v1502 = vsel %vm163, %v1496, 0.0
    %1503 = vadd.xlane.f32.xlu0 %v1502
    %v1504 = vpop.xlane.xlu0 %1503
    %v1505 = vsel %vm163, %v1497, 0.0
    %1506 = vadd.xlane.f32.xlu0 %v1505
    %v1507 = vpop.xlane.xlu0 %1506
    %v1508 = vsel %vm163, %v1498, 0.0
    %1509 = vadd.xlane.f32.xlu0 %v1508
    %v1510 = vpop.xlane.xlu0 %1509
    %v1511 = vmul.f32 %v1501, %v182
    %v1512 = vmul.f32 %v1504, %v182
    %v1513 = vmul.f32 %v1507, %v182
    %v1514 = vmul.f32 %v1510, %v182
    %v1515 = vsub.f32 %v1495, %v1511
    %v1516 = vsub.f32 %v1496, %v1512
    %v1517 = vsub.f32 %v1497, %v1513
    %v1518 = vsub.f32 %v1498, %v1514
    %v1519 = vmul.f32 %v1515, %v1515
    %v1520 = vmul.f32 %v1516, %v1516
    %v1521 = vmul.f32 %v1517, %v1517
    %v1522 = vmul.f32 %v1518, %v1518
    %v1523 = vsel %vm163, %v1519, 0.0
    %1524 = vadd.xlane.f32.xlu0 %v1523
    %v1525 = vpop.xlane.xlu0 %1524
    %v1526 = vsel %vm163, %v1520, 0.0
    %1527 = vadd.xlane.f32.xlu0 %v1526
    %v1528 = vpop.xlane.xlu0 %1527
    %v1529 = vsel %vm163, %v1521, 0.0
    %1530 = vadd.xlane.f32.xlu0 %v1529
    %v1531 = vpop.xlane.xlu0 %1530
    %v1532 = vsel %vm163, %v1522, 0.0
    %1533 = vadd.xlane.f32.xlu0 %v1532
    %v1534 = vpop.xlane.xlu0 %1533
    %v1535 = vmul.f32 %v1525, %v182
    %v1536 = vmul.f32 %v1528, %v182
    %v1537 = vmul.f32 %v1531, %v182
    %v1538 = vmul.f32 %v1534, %v182
    %v1539 = vadd.f32 %v1535, 1e-12
    %v1540 = vadd.f32 %v1536, 1e-12
    %v1541 = vadd.f32 %v1537, 1e-12
    %v1542 = vadd.f32 %v1538, 1e-12
    %v1543 = vrsqrt.pop %v1539
    %v1544 = vmul.f32 %v1543, %v1539
    %v1545 = vmul.f32 %v1544, %v1543
    %v1546 = vmul.f32 0.5, %v1545
    %v1547 = vsub.f32 1.5, %v1546
    %v1548 = vmul.f32 %v1543, %v1547
    %vm1549 = vweird.f32 %v1539
    %vm1550 = vweird.f32 %v1543
    %vm1551 = vmor %vm1549, %vm1550
    %v1552 = vsel %vm1551, %v1543, %v1548
    %v1553 = vrsqrt.pop %v1540
    %v1554 = vmul.f32 %v1553, %v1540
    %v1555 = vmul.f32 %v1554, %v1553
    %v1556 = vmul.f32 0.5, %v1555
    %v1557 = vsub.f32 1.5, %v1556
    %v1558 = vmul.f32 %v1553, %v1557
    %vm1559 = vweird.f32 %v1540
    %vm1560 = vweird.f32 %v1553
    %vm1561 = vmor %vm1559, %vm1560
    %v1562 = vsel %vm1561, %v1553, %v1558
    %v1563 = vrsqrt.pop %v1541
    %v1564 = vmul.f32 %v1563, %v1541
    %v1565 = vmul.f32 %v1564, %v1563
    %v1566 = vmul.f32 0.5, %v1565
    %v1567 = vsub.f32 1.5, %v1566
    %v1568 = vmul.f32 %v1563, %v1567
    %vm1569 = vweird.f32 %v1541
    %vm1570 = vweird.f32 %v1563
    %vm1571 = vmor %vm1569, %vm1570
    %v1572 = vsel %vm1571, %v1563, %v1568
    %v1573 = vrsqrt.pop %v1542
    %v1574 = vmul.f32 %v1573, %v1542
    %v1575 = vmul.f32 %v1574, %v1573
    %v1576 = vmul.f32 0.5, %v1575
    %v1577 = vsub.f32 1.5, %v1576
    %v1578 = vmul.f32 %v1573, %v1577
    %vm1579 = vweird.f32 %v1542
    %vm1580 = vweird.f32 %v1573
    %vm1581 = vmor %vm1579, %vm1580
    %v1582 = vsel %vm1581, %v1573, %v1578
    %v1583 = vmul.f32 %v1515, %v1552
    %v1584 = vmul.f32 %v1516, %v1562
    %v1585 = vmul.f32 %v1517, %v1572
    %v1586 = vmul.f32 %v1518, %v1582
    %v1587 = vmul.f32 %v1583, %v869
    %v1588 = vmul.f32 %v1584, %v869
    %v1589 = vmul.f32 %v1585, %v869
    %v1590 = vmul.f32 %v1586, %v869
    %v1591 = vadd.f32 %v1587, %v874
    %v1592 = vadd.f32 %v1588, %v874
    %v1593 = vadd.f32 %v1589, %v874
    %v1594 = vadd.f32 %v1590, %v874
    %v1596 = vsel %vm163, %v1591, 0
    %v1599 = vsel %vm163, %v1592, 0
    %v1602 = vsel %vm163, %v1593, 0
    %v1605 = vsel %vm163, %v1594, 0
    %1607 = vmatpush.msra.mxu0 0.0
    %1608 = vmatpush.msra.mxu0 0.0
    %1609 = vmatpush.msra.mxu0 0.0
    %1610 = vmatpush.msra.mxu0 0.0
    %1611 = vmatpush.msra.mxu0 0.0
    %1612 = vmatpush.msra.mxu0 0.0
    %1613 = vmatpush.msra.mxu0 0.0
    %1614 = vmatpush.msra.mxu0 0.0
    %1615 = vmatpush.msra.mxu0 0.0
    %1616 = vmatpush.msra.mxu0 0.0
    %1617 = vmatpush.msra.mxu0 0.0
    %1618 = vmatpush.msra.mxu0 0.0
    %1619 = vmatpush.msra.mxu0 %v57
    %1620 = vmatpush.msra.mxu0 %v56
    %1621 = vmatpush.msra.mxu0 %v55
    %1622 = vmatpush.msra.mxu0 %v54
    %1623 = vmatmul.f32.gmra.mxu0 %v1596
    %v1624 = vpop.f32.mrf.mxu0
    %v1625 = vadd.f32 %v879, %v1624
    %1626 = vmatmul.f32.gmra.mxu0 %v1599
    %v1627 = vpop.f32.mrf.mxu0
    %v1628 = vadd.f32 %v879, %v1627
    %1629 = vmatmul.f32.gmra.mxu0 %v1602
    %v1630 = vpop.f32.mrf.mxu0
    %v1631 = vadd.f32 %v879, %v1630
    %1632 = vmatmul.f32.gmra.mxu0 %v1605
    %v1633 = vpop.f32.mrf.mxu0
    %v1634 = vadd.f32 %v879, %v1633
    %1635 = vdwg.mxu0
    %v1636 = vmul.f32 %v1625, 0.5
    %v1637 = vmul.f32 %v1628, 0.5
    %v1638 = vmul.f32 %v1631, 0.5
    %v1639 = vmul.f32 %v1634, 0.5
    %v1640 = vmul.f32 %v1625, 0.044715
    %v1641 = vmul.f32 %v1628, 0.044715
    %v1642 = vmul.f32 %v1631, 0.044715
    %v1643 = vmul.f32 %v1634, 0.044715
    %v1644 = vmul.f32 %v1640, %v1625
    %v1645 = vmul.f32 %v1641, %v1628
    %v1646 = vmul.f32 %v1642, %v1631
    %v1647 = vmul.f32 %v1643, %v1634
    %v1648 = vmul.f32 %v1644, %v1625
    %v1649 = vmul.f32 %v1645, %v1628
    %v1650 = vmul.f32 %v1646, %v1631
    %v1651 = vmul.f32 %v1647, %v1634
    %v1652 = vadd.f32 %v1625, %v1648
    %v1653 = vadd.f32 %v1628, %v1649
    %v1654 = vadd.f32 %v1631, %v1650
    %v1655 = vadd.f32 %v1634, %v1651
    %v1656 = vmul.f32 %v1652, 0.7978846
    %v1657 = vmul.f32 %v1653, 0.7978846
    %v1658 = vmul.f32 %v1654, 0.7978846
    %v1659 = vmul.f32 %v1655, 0.7978846
    %v1660 = vtanh.pop %v1656
    %v1661 = vtanh.pop %v1657
    %v1662 = vtanh.pop %v1658
    %v1663 = vtanh.pop %v1659
    %v1664 = vadd.f32 %v1660, 1.0
    %v1665 = vadd.f32 %v1661, 1.0
    %v1666 = vadd.f32 %v1662, 1.0
    %v1667 = vadd.f32 %v1663, 1.0
    %v1668 = vmul.f32 %v1636, %v1664
    %v1669 = vmul.f32 %v1637, %v1665
    %v1670 = vmul.f32 %v1638, %v1666
    %v1671 = vmul.f32 %v1639, %v1667
    %v1673 = vsel %vm958, %v1668, 0
    %v1676 = vsel %vm958, %v1669, 0
    %v1679 = vsel %vm958, %v1670, 0
    %v1682 = vsel %vm958, %v1671, 0
    %1684 = vmatpush.msra.mxu0 0.0
    %1685 = vmatpush.msra.mxu0 0.0
    %1686 = vmatpush.msra.mxu0 0.0
    %1687 = vmatpush.msra.mxu0 0.0
    %1688 = vmatpush.msra.mxu0 0.0
    %1689 = vmatpush.msra.mxu0 0.0
    %1690 = vmatpush.msra.mxu0 0.0
    %1691 = vmatpush.msra.mxu0 0.0
    %1692 = vmatpush.msra.mxu0 %v65
    %1693 = vmatpush.msra.mxu0 %v64
    %1694 = vmatpush.msra.mxu0 %v63
    %1695 = vmatpush.msra.mxu0 %v62
    %1696 = vmatpush.msra.mxu0 %v61
    %1697 = vmatpush.msra.mxu0 %v60
    %1698 = vmatpush.msra.mxu0 %v59
    %1699 = vmatpush.msra.mxu0 %v58
    %1700 = vmatmul.f32.gmra.mxu0 %v1673
    %v1701 = vpop.f32.mrf.mxu0
    %v1702 = vadd.f32 %v957, %v1701
    %1703 = vmatmul.f32.gmra.mxu0 %v1676
    %v1704 = vpop.f32.mrf.mxu0
    %1705 = vmatmul.f32.gmra.mxu0 %v1679
    %v1706 = vpop.f32.mrf.mxu0
    %1707 = vmatmul.f32.gmra.mxu0 %v1682
    %v1708 = vpop.f32.mrf.mxu0
    %1709 = vdwg.mxu0
    %v1710 = vadd.f32 %v1591, %v1702
    %v1711 = vsel %vm163, %v1710, 0.0
    %1712 = vadd.xlane.f32.xlu0 %v1711
    %v1713 = vpop.xlane.xlu0 %1712
    %v1714 = vmul.f32 %v1713, %v182
    %v1715 = vsub.f32 %v1710, %v1714
    %v1716 = vmul.f32 %v1715, %v1715
    %v1717 = vsel %vm163, %v1716, 0.0
    %1718 = vadd.xlane.f32.xlu0 %v1717
    %v1719 = vpop.xlane.xlu0 %1718
    %v1720 = vmul.f32 %v1719, %v182
    %v1721 = vadd.f32 %v1720, 1e-12
    %v1722 = vrsqrt.pop %v1721
    %v1723 = vmul.f32 %v1722, %v1721
    %v1724 = vmul.f32 %v1723, %v1722
    %v1725 = vmul.f32 0.5, %v1724
    %v1726 = vsub.f32 1.5, %v1725
    %v1727 = vmul.f32 %v1722, %v1726
    %vm1728 = vweird.f32 %v1721
    %vm1729 = vweird.f32 %v1722
    %vm1730 = vmor %vm1728, %vm1729
    %v1731 = vsel %vm1730, %v1722, %v1727
    %v1732 = vmul.f32 %v1715, %v1731
    %v1733 = vmul.f32 %v1732, %v1092
    %v1734 = vadd.f32 %v1733, %v1097
    %v1735 = vperm.slane %v101, 0
    %v1736 = vmul.f32 %v1734, %v1735
    %vm1737 = vcmask 257024
    %v1738 = vsel %vm1737, %v1736, 0.0
    %1739 = vadd.xlane.f32.xlu0 %v1738
    %v1740 = vpop.xlane.xlu0 %1739
    %v1741 = vperm.slane %v100, 0
    %v1742 = vadd.f32 %v1740, %v1741
    %v1744 = vrot.slane %v1742, 2
    %1745 = vrot.lane.b32.xlu0 %v1744, 1
    %v1746 = vpop.permute.xlu0 %1745
    %vm1748 = vcmask 7168
    %v1749 = vsel %vm1748, %v1742, %v1746
    %vm1750 = vcmask 9216
    %v1751 = vsel %vm1750, %v1749, -inf
    %1752 = vmax.xlane.f32.xlu0 %v1751
    %v1753 = vpop.xlane.xlu0 %1752
    %v1754 = vsub.f32 %v1749, %v1753
    %v1755 = vmul.f32 %v1754, 1.442695
    %v1756 = vpow.pop %v1755
    %v1757 = vsel %vm1750, %v1756, 0.0
    %1758 = vadd.xlane.f32.xlu0 %v1757
    %v1759 = vpop.xlane.xlu0 %1758
    %v1760 = vrcp.pop %v1759
    %v1761 = vmul.f32 %v1759, %v1760
    %v1762 = vsub.f32 1.0, %v1761
    %v1763 = vmul.f32 %v1760, %v1762
    %v1764 = vadd.f32 %v1760, %v1763
    %vm1765 = vweird.f32 %v1759
    %vm1766 = vweird.f32 %v1760
    %vm1767 = vmor %vm1765, %vm1766
    %v1768 = vsel %vm1767, %v1760, %v1764
    %v1769 = vand.u32 2147483647, %v1759
    %vm1770 = vcmp.eq.f32.partialorder %v1769, 8.507059e+37
    %v1771 = vand.u32 %v1759, 2147483648
    %v1772 = vor.u32 1.1754944e-38, %v1771
    %v1773 = vsel %vm1770, %v1772, %v1768
    %v1774 = vmul.f32 %v1756, %v1773
    %v1775 = vsel %vm1750, %v1774, -inf
    %1776 = vmax.xlane.f32.xlu0 %v1775
    %v1777 = vpop.xlane.xlu0 %1776
    %v1778 = vsub.f32 %v1774, %v1777
    %v1779 = vmul.f32 %v1778, 1.442695
    %v1780 = vpow.pop %v1779
    %v1781 = vsel %vm1750, %v1780, 0.0
    %1782 = vadd.xlane.f32.xlu0 %v1781
    %v1783 = vpop.xlane.xlu0 %1782
    %v1784 = vlog2.pop %v1783
    %v1785 = vmul.f32 %v1784, 0.6931472
    %v1786 = vadd.f32 %v1777, %v1785
    %v1787 = vmul.f32 %v1774, %v103
    %v1788 = vsel %vm1750, %v1787, 0.0
    %1789 = vadd.xlane.f32.xlu0 %v1788
    %v1790 = vpop.xlane.xlu0 %1789
    %v1791 = vsub.f32 %v1786, %v1790
    %vm1792 = vcmask 1024
    %v1793 = vsel %vm1792, %v1791, 0.0
    %1794 = vadd.xlane.f32.xlu0 %v1793
    %v1795 = vpop.xlane.xlu0 %1794
    %v1796 = vrot.slane %v1795, 4
    %v1797 = vadd.f32 %v1795, %v1796
    %v1798 = vrot.slane %v1797, 2
    %v1799 = vadd.f32 %v1797, %v1798
    %v1800 = vrot.slane %v1799, 1
    %v1801 = vadd.f32 %v1799, %v1800
    %s1802 = vtos %v1801
    %v1803 = vstv %s1802
    %v1804 = vrcp.pop 2.0
    %v1805 = vmul.f32 2.0, %v1804
    %v1806 = vsub.f32 1.0, %v1805
    %v1807 = vmul.f32 %v1804, %v1806
    %v1808 = vadd.f32 %v1804, %v1807
    %vm1809 = vweird.f32 %v1804
    %v1810 = vsel %vm1809, %v1804, %v1808
    %v1811 = vmul.f32 %v1803, %v1810
    %v1813 = vsub.f32 %v1742, %v1744
    %v1814 = vadd.f32 %v1813, 1e-06
    %v1815 = vmul.f32 %v1814, %v1814
    %v1816 = vadd.f32 %v1815, 0.0
    %v1817 = vrsqrt.pop %v1816
    %v1818 = vmul.f32 %v1817, %v1816
    %v1819 = vmul.f32 %v1818, %v1817
    %v1820 = vmul.f32 0.5, %v1819
    %v1821 = vsub.f32 1.5, %v1820
    %v1822 = vmul.f32 %v1817, %v1821
    %v1823 = vmul.f32 %v1816, %v1822
    %vm1824 = vcmp.eq.f32.partialorder %v1816, inf
    %v1825 = vsel %vm1824, %v1816, %v1823
    %vm1826 = vcmp.eq.f32.partialorder %v1816, 0.0
    %v1827 = vand.u32 %v1816, 2147483648
    %v1828 = vsel %vm1826, %v1827, %v1825
    %v1829 = vsel %vm1792, %v1828, 0.0
    %1830 = vadd.xlane.f32.xlu0 %v1829
    %v1831 = vpop.xlane.xlu0 %1830
    %v1832 = vrot.slane %v1831, 4
    %v1833 = vadd.f32 %v1831, %v1832
    %v1834 = vrot.slane %v1833, 2
    %v1835 = vadd.f32 %v1833, %v1834
    %v1836 = vrot.slane %v1835, 1
    %v1837 = vadd.f32 %v1835, %v1836
    %s1838 = vtos %v1837
    %v1839 = vstv %s1838
    %v1840 = vmul.f32 %v1839, %v1810
    %1841 = vst [vmem:[%s3] sm:$0xff] 0.0
    %1842 = vst.msk [vmem:[%s3] sm:$0x3] %vm1750, %v1749
    %1843 = vst.msk [vmem:[%s3 + $0x2] sm:$0x3] %vm1750, %v1774
    %v1844 = vsel %vm1748, %v1811, %v1840
    %vm1845 = vcmask 8192
    %1846 = vst.msk [vmem:[%s3 + $0x4] sm:$0x1] %vm1845, %v1844
    // Predicated region
    $region18: #{albert_copa_forward.1} parent=1 // pred_check
      _
    $region19: #{albert_copa_forward.1} parent=1 // pred_check_branch
      %1848 = sbr.rel (0) target = $region21
    $region20: #{albert_copa_forward.1} parent=1 // pred_region
      _
    $region21: #{albert_copa_forward.1} parent=1 // pred_fallthru
      _
    // Predicated region
    $region22: #{albert_copa_forward.1} parent=1 // pred_check
      _
    $region23: #{albert_copa_forward.1} parent=1 // pred_check_branch
      %1850 = sbr.rel (0) target = $region25
    $region24: #{albert_copa_forward.1} parent=1 // pred_region
      _
    $region25: #{albert_copa_forward.1} parent=1 // pred_fallthru
      _
    %1851 = vsyncpa [#allocation3], 1

</llo_original>
